<compile_context>
chip_gen: v7x
topology: tpu7x:2x2x1
jax: 0.10.0
libtpu: 0.0.40
codegen_flags: <defaults>
</compile_context>

<pallas_src>
import functools

import jax
import jax.numpy as jnp
from jax import lax
from jax.experimental import pallas as pl
from jax.experimental.pallas import tpu as pltpu

EPS = 1e-5      # nn.BatchNorm2d default eps
SLOPE = 0.2     # LeakyReLU negative slope


def _round_up(x, m):
    return ((x + m - 1) // m) * m


# ----------------------------------------------------------------------------
# Pallas kernel 1: matmul (bf16 MXU, f32 accumulate) + per-tile column
# sum / sum-of-squares epilogue (feeds the two-pass BatchNorm without an
# extra read of the output slab).
# ----------------------------------------------------------------------------
def _mm_stats_kernel(a_ref, b_ref, o_ref, stat_ref):
    y = jnp.dot(a_ref[...], b_ref[...], preferred_element_type=jnp.float32)
    o_ref[...] = y
    s = jnp.sum(y, axis=0, keepdims=True)           # (1, C) column sums
    ss = jnp.sum(y * y, axis=0, keepdims=True)      # (1, C) column sum-squares
    row = lax.broadcasted_iota(jnp.int32, stat_ref.shape, 0)
    stat_ref[...] = jnp.where(row == 0, s, jnp.where(row == 1, ss, 0.0))


def pallas_matmul_stats(a, b, tm=256):
    """(M,K) @ (K,C) -> (f32 (M,C), col_sum (C,), col_sumsq (C,))."""
    M, K = a.shape
    K2, C = b.shape
    assert K == K2
    a = a.astype(jnp.bfloat16)      # bf16-native MXU; halves A/B DMA bytes
    b = b.astype(jnp.bfloat16)
    tm = min(tm, _round_up(M, 16))
    Mp = _round_up(M, tm)
    if Mp != M:
        a = jnp.pad(a, ((0, Mp - M), (0, 0)))       # zero rows: stats unaffected
    nt = Mp // tm
    out, stats = pl.pallas_call(
        _mm_stats_kernel,
        out_shape=(jax.ShapeDtypeStruct((Mp, C), jnp.float32),
                   jax.ShapeDtypeStruct((nt * 8, C), jnp.float32)),
        grid=(nt,),
        in_specs=[pl.BlockSpec((tm, K), lambda i: (i, 0)),
                  pl.BlockSpec((K, C), lambda i: (0, 0))],
        out_specs=(pl.BlockSpec((tm, C), lambda i: (i, 0)),
                   pl.BlockSpec((8, C), lambda i: (i, 0))),
        compiler_params=pltpu.CompilerParams(
            dimension_semantics=("parallel",)),
    )(a, b)
    stats = stats.reshape(nt, 8, C)
    return out[:M], stats[:, 0, :].sum(0), stats[:, 1, :].sum(0)


# ----------------------------------------------------------------------------
# Pallas kernel 2: tiled  y = lrelu(x * scale + shift)   (block1 BN epilogue)
# ----------------------------------------------------------------------------
def _scale_shift_lrelu_kernel(x_ref, a_ref, b_ref, o_ref, *, slope):
    y = x_ref[...] * a_ref[...] + b_ref[...]
    o_ref[...] = jnp.where(y >= 0, y, slope * y)


def pallas_scale_shift_lrelu(x2d, scale_cols, shift_cols, tm=512):
    M, C = x2d.shape
    tm = min(tm, _round_up(M, 8))
    Mp = _round_up(M, tm)
    if Mp != M:
        x2d = jnp.pad(x2d, ((0, Mp - M), (0, 0)))
    out = pl.pallas_call(
        functools.partial(_scale_shift_lrelu_kernel, slope=SLOPE),
        out_shape=jax.ShapeDtypeStruct((Mp, C), jnp.float32),
        grid=(Mp // tm,),
        in_specs=[pl.BlockSpec((tm, C), lambda i: (i, 0)),
                  pl.BlockSpec((1, C), lambda i: (0, 0)),
                  pl.BlockSpec((1, C), lambda i: (0, 0))],
        out_specs=pl.BlockSpec((tm, C), lambda i: (i, 0)),
        compiler_params=pltpu.CompilerParams(
            dimension_semantics=("parallel",)),
    )(x2d, scale_cols.reshape(1, C), shift_cols.reshape(1, C))
    return out[:M]


# ----------------------------------------------------------------------------
# Pallas kernel 3: fused residual epilogue
#   y = lrelu( x*ax + bx  +  r*ar + br )  over two matching lane-dense slabs
# ----------------------------------------------------------------------------
def _dual_scale_add_lrelu_kernel(x_ref, ax_ref, bx_ref, r_ref, ar_ref, br_ref,
                                 o_ref, *, slope):
    y = (x_ref[...] * ax_ref[...] + bx_ref[...]
         + r_ref[...] * ar_ref[...] + br_ref[...])
    o_ref[...] = jnp.where(y >= 0, y, slope * y)


def pallas_dual_scale_add_lrelu(x2d, ax, bx, r2d, ar, br, tm=512):
    M, C = x2d.shape
    tm = min(tm, _round_up(M, 8))
    Mp = _round_up(M, tm)
    if Mp != M:
        x2d = jnp.pad(x2d, ((0, Mp - M), (0, 0)))
        r2d = jnp.pad(r2d, ((0, Mp - M), (0, 0)))
    slab = lambda: pl.BlockSpec((tm, C), lambda i: (i, 0))
    vec = lambda: pl.BlockSpec((1, C), lambda i: (0, 0))
    out = pl.pallas_call(
        functools.partial(_dual_scale_add_lrelu_kernel, slope=SLOPE),
        out_shape=jax.ShapeDtypeStruct((Mp, C), jnp.float32),
        grid=(Mp // tm,),
        in_specs=[slab(), vec(), vec(), slab(), vec(), vec()],
        out_specs=slab(),
        compiler_params=pltpu.CompilerParams(
            dimension_semantics=("parallel",)),
    )(x2d, ax.reshape(1, C), bx.reshape(1, C),
      r2d, ar.reshape(1, C), br.reshape(1, C))
    return out[:M]


# ----------------------------------------------------------------------------
# ConvTranspose2d lowering (layout glue in the wrapper, matmuls in Pallas)
# ----------------------------------------------------------------------------
def _patches_3x3(x_nhwc):
    """(N,H,W,Ci) -> (N*H*W, 9*Ci): 3x3 windows of the 1-padded input."""
    N, H, W, Ci = x_nhwc.shape
    xp = jnp.pad(x_nhwc, ((0, 0), (1, 1), (1, 1), (0, 0)))
    cols = [xp[:, u:u + H, v:v + W, :] for u in range(3) for v in range(3)]
    # TODO(synk): stream the 9 (u,v) offsets through a grid axis with a VMEM
    # accumulator instead of materializing the 9x patch slab via XLA.
    return jnp.stack(cols, axis=3).reshape(N * H * W, 9 * Ci)


def _stride2_weight_matrix(w):
    """PyTorch ConvTranspose2d weight (Ci,Co,4,4), stride 2, pad 1 ->
    sub-pixel matrix (9*Ci, 4*Co).  Rows ordered (u, v, ci) to match
    _patches_3x3; output columns ordered (r, s, co) where (r, s) is the 2x2
    output phase:  out[n, 2i+r, 2j+s, co] = patch3x3(n,i,j) @ B[:, (r,s,co)]."""
    Ci, Co, K, _ = w.shape
    assert K == 4
    B = jnp.zeros((3, 3, Ci, 2, 2, Co), jnp.float32)
    for r in range(2):
        for s in range(2):
            for dh in range(2):
                for dw in range(2):
                    kh = 3 - r - 2 * dh
                    kw = 3 - s - 2 * dw
                    B = B.at[r + dh, s + dw, :, r, s, :].set(w[:, :, kh, kw])
    return B.reshape(9 * Ci, 4 * Co)


def _stride4_weight_matrix(w):
    """ConvTranspose2d (Ci,Co,4,4), stride 4, pad 0 -> (Ci, 16*Co); columns
    ordered (a, b, co):  out[n, 4i+a, 4j+b, co] = x[n,i,j,:] @ B[:, (a,b,co)]."""
    Ci, Co, K, _ = w.shape
    assert K == 4
    return jnp.transpose(w, (0, 2, 3, 1)).reshape(Ci, 16 * Co)


def _pixel_shuffle(mat, N, H, W, k, Co):
    """(N*H*W, k*k*Co) with cols (a, b, co) -> NHWC (N, k*H, k*W, Co)."""
    t = mat.reshape(N, H, W, k, k, Co)
    return jnp.transpose(t, (0, 1, 3, 2, 4, 5)).reshape(N, k * H, k * W, Co)


def _s2cols_to_s4cols(c2mat, N, H, W, Co):
    """Re-index the block2 matmul output (rows = N*(2H)*(2W), cols = (r,s,co))
    into the downsample layout (rows = N*H*W, cols = (a,b,co), a=2p+r, b=2q+s)
    so the residual add is elementwise over two identical slabs."""
    t = c2mat.reshape(N, H, 2, W, 2, 2, 2, Co)        # (n, i, p, j, q, r, s, co)
    t = jnp.transpose(t, (0, 1, 3, 2, 5, 4, 6, 7))    # (n, i, j, p, r, q, s, co)
    return t.reshape(N * H * W, 16 * Co)


def _bn_scale_shift(col_sum, col_sumsq, rows, gamma, beta, phases):
    """Training-mode BatchNorm (biased variance) per channel.  Matmul columns
    are ordered (phase, channel); the `phases` sub-pixel positions fold back
    into the per-channel reduction.  Returns per-channel scale/shift."""
    Co = gamma.shape[0]
    n = float(rows * phases)
    mean = col_sum.reshape(phases, Co).sum(0) / n
    var = col_sumsq.reshape(phases, Co).sum(0) / n - mean * mean
    var = jnp.maximum(var, 0.0)
    scale = gamma * lax.rsqrt(var + EPS)
    shift = beta - mean * scale
    return scale, shift


# ----------------------------------------------------------------------------
# ResTransBlock forward (Pallas path)
# ----------------------------------------------------------------------------
def res_trans_block(params, x_nchw):
    x = jnp.transpose(x_nchw, (0, 2, 3, 1)).astype(jnp.float32)   # NCHW -> NHWC
    N, H, W, Ci = x.shape
    Cm = params["w1"].shape[1]
    Co = params["w2"].shape[1]

    # ---- block1: ConvT(s=2,p=1) -> BN -> LeakyReLU -------------------------
    c1, s1, ss1 = pallas_matmul_stats(_patches_3x3(x),
                                      _stride2_weight_matrix(params["w1"]))
    sc1, sh1 = _bn_scale_shift(s1, ss1, N * H * W,
                               params["g1"], params["b1"], phases=4)
    h1 = pallas_scale_shift_lrelu(c1, jnp.tile(sc1, 4), jnp.tile(sh1, 4))
    h1 = _pixel_shuffle(h1, N, H, W, 2, Cm)                       # (N,2H,2W,Cm)

    # ---- block2 conv (s=2,p=1) ---------------------------------------------
    c2, s2, ss2 = pallas_matmul_stats(_patches_3x3(h1),
                                      _stride2_weight_matrix(params["w2"]))
    sc2, sh2 = _bn_scale_shift(s2, ss2, N * 2 * H * 2 * W,
                               params["g2"], params["b2"], phases=4)

    # ---- downsample conv (s=4,p=0): exactly one matmul, no patches ---------
    cd, sd, ssd = pallas_matmul_stats(x.reshape(N * H * W, Ci),
                                      _stride4_weight_matrix(params["wd"]))
    scd, shd = _bn_scale_shift(sd, ssd, N * H * W,
                               params["gd"], params["bd"], phases=16)

    # ---- fused BN(block2) + BN(downsample) + residual add + LeakyReLU ------
    c2r = _s2cols_to_s4cols(c2, N, H, W, Co)                      # (N*H*W,16Co)
    y = pallas_dual_scale_add_lrelu(
        c2r, jnp.tile(sc2, 16), jnp.tile(sh2, 16),
        cd, jnp.tile(scd, 16), jnp.tile(shd, 16))
    y = _pixel_shuffle(y, N, H, W, 4, Co)                         # (N,4H,4W,Co)
    return jnp.transpose(y, (0, 3, 1, 2))                         # -> NCHW


# ----------------------------------------------------------------------------
# Pure-JAX reference (f32 HIGHEST precision, for the numerical check)
# ----------------------------------------------------------------------------
def _ref_convt(x_nhwc, w, stride, pad):
    K = w.shape[-1]
    wf = jnp.transpose(w[:, :, ::-1, ::-1], (2, 3, 0, 1))   # -> HWIO
    return lax.conv_general_dilated(
        x_nhwc, wf, window_strides=(1, 1),
        padding=[(K - 1 - pad, K - 1 - pad)] * 2,
        lhs_dilation=(stride, stride),
        dimension_numbers=("NHWC", "HWIO", "NHWC"),
        precision=lax.Precision.HIGHEST)


def _ref_bn(x, g, b):
    mean = jnp.mean(x, axis=(0, 1, 2), keepdims=True)
    var = jnp.mean((x - mean) ** 2, axis=(0, 1, 2), keepdims=True)
    return (x - mean) * lax.rsqrt(var + EPS) * g + b


def res_trans_block_ref(params, x_nchw):
    lrelu = lambda t: jnp.where(t >= 0, t, SLOPE * t)
    x = jnp.transpose(x_nchw, (0, 2, 3, 1))
    out = lrelu(_ref_bn(_ref_convt(x, params["w1"], 2, 1),
                        params["g1"], params["b1"]))
    out = _ref_bn(_ref_convt(out, params["w2"], 2, 1),
                  params["g2"], params["b2"])
    res = _ref_bn(_ref_convt(x, params["wd"], 4, 0),
                  params["gd"], params["bd"])
    return jnp.transpose(lrelu(out + res), (0, 3, 1, 2))


# ----------------------------------------------------------------------------
if __name__ == "__main__":
    key = jax.random.PRNGKey(0)
    inplanes = 16
    mid, out_ch = inplanes // 2, inplanes // 4
    N, H, W = 2, 8, 8

    ks = jax.random.split(key, 10)
    f32 = jnp.float32
    params = {
        "w1": 0.1 * jax.random.normal(ks[0], (inplanes, mid, 4, 4), f32),
        "g1": 1.0 + 0.1 * jax.random.normal(ks[1], (mid,), f32),
        "b1": 0.1 * jax.random.normal(ks[2], (mid,), f32),
        "w2": 0.1 * jax.random.normal(ks[3], (mid, out_ch, 4, 4), f32),
        "g2": 1.0 + 0.1 * jax.random.normal(ks[4], (out_ch,), f32),
        "b2": 0.1 * jax.random.normal(ks[5], (out_ch,), f32),
        "wd": 0.1 * jax.random.normal(ks[6], (inplanes, out_ch, 4, 4), f32),
        "gd": 1.0 + 0.1 * jax.random.normal(ks[7], (out_ch,), f32),
        "bd": 0.1 * jax.random.normal(ks[8], (out_ch,), f32),
    }
    x = jax.random.normal(ks[9], (N, inplanes, H, W), f32)   # NCHW input

    y = jax.block_until_ready(jax.jit(res_trans_block)(params, x))
    assert y.shape == (N, out_ch, 4 * H, 4 * W), y.shape

    y_ref = res_trans_block_ref(params, x)
    err = float(jnp.max(jnp.abs(y - y_ref)))
    # MXU runs single-pass bf16 (Precision.HIGHEST dropped per perf review),
    # so tolerance is sized for bf16 operand rounding through two chained
    # convs + BN; indexing/layout bugs would produce O(1) errors.
    assert err < 5e-2, f"max abs error vs reference: {err}"

    print("KERNEL_OK")
</pallas_src>

<mosaic_0001>
module attributes {stable_mosaic.version = 11 : i64} {
  func.func @_mm_stats_kernel(%arg0: i32, %arg1: memref<128x144xbf16, #tpu.memory_space<vmem>>, %arg2: memref<144x32xbf16, #tpu.memory_space<vmem>>, %arg3: memref<128x32xf32, #tpu.memory_space<vmem>>, %arg4: memref<8x32xf32, #tpu.memory_space<vmem>>) attributes {dimension_semantics = [#tpu.dimension_semantics<parallel>], iteration_bounds = array<i64: 1>, scalar_prefetch = 0 : i64, scratch_operands = 0 : i64, tpu.core_type = #tpu.core_type<tc>, window_params = [{transform_indices = @transform_0, window_bounds = array<i64: 128, 144>}, {pipeline_mode = #tpu.pipeline_mode<synchronous>, transform_indices = @transform_1, window_bounds = array<i64: 144, 32>}, {transform_indices = @transform_2, window_bounds = array<i64: 128, 32>}, {transform_indices = @transform_3, window_bounds = array<i64: 8, 32>}]} {
    %c0 = arith.constant 0 : index
    %c0_0 = arith.constant 0 : index
    %0 = vector.load %arg1[%c0, %c0_0] : memref<128x144xbf16, #tpu.memory_space<vmem>>, vector<128x144xbf16>
    %c0_1 = arith.constant 0 : index
    %c0_2 = arith.constant 0 : index
    %1 = vector.load %arg2[%c0_1, %c0_2] : memref<144x32xbf16, #tpu.memory_space<vmem>>, vector<144x32xbf16>
    %cst = arith.constant dense<0.000000e+00> : vector<128x32xf32>
    %2 = tpu.matmul %0, %1, %cst {dimension_numbers = #tpu.dot_dimension_numbers<[1], [0], [0], [1], [0, 0, 1, 1], [], []>} : vector<128x144xbf16>, vector<144x32xbf16>, vector<128x32xf32> -> vector<128x32xf32>
    %c0_3 = arith.constant 0 : index
    %c0_4 = arith.constant 0 : index
    %3 = vector.load %arg3[%c0_3, %c0_4] : memref<128x32xf32, #tpu.memory_space<vmem>>, vector<128x32xf32>
    tpu.vector_store %arg3[%c0_3, %c0_4], %2 {strides = array<i32>} : memref<128x32xf32, #tpu.memory_space<vmem>>, vector<128x32xf32>,
    %cst_5 = arith.constant dense<0.000000e+00> : vector<32xf32>
    %4 = vector.multi_reduction <add>, %2, %cst_5 [0] : vector<128x32xf32> to vector<32xf32>
    %5 = vector.shape_cast %4 : vector<32xf32> to vector<1x32xf32>
    %6 = arith.mulf %2, %2 : vector<128x32xf32>
    %cst_6 = arith.constant dense<0.000000e+00> : vector<32xf32>
    %7 = vector.multi_reduction <add>, %6, %cst_6 [0] : vector<128x32xf32> to vector<32xf32>
    %8 = vector.shape_cast %7 : vector<32xf32> to vector<1x32xf32>
    %9 = tpu.iota {dimensions = array<i32: 0>} : vector<8x32xi32>
    %c0_i32 = arith.constant 0 : i32
    %10 = vector.broadcast %c0_i32 : i32 to vector<8x32xi32>
    %11 = arith.cmpi eq, %9, %10 : vector<8x32xi32>
    %c1_i32 = arith.constant 1 : i32
    %12 = vector.broadcast %c1_i32 : i32 to vector<8x32xi32>
    %13 = arith.cmpi eq, %9, %12 : vector<8x32xi32>
    %cst_7 = arith.constant 0.000000e+00 : f32
    %14 = vector.shape_cast %8 : vector<1x32xf32> to vector<1x32xf32>
    %15 = vector.broadcast %14 : vector<1x32xf32> to vector<8x32xf32>
    %16 = vector.broadcast %cst_7 : f32 to vector<8x32xf32>
    %17 = arith.select %13, %15, %16 : vector<8x32xi1>, vector<8x32xf32>
    %18 = vector.shape_cast %5 : vector<1x32xf32> to vector<1x32xf32>
    %19 = vector.broadcast %18 : vector<1x32xf32> to vector<8x32xf32>
    %20 = arith.select %11, %19, %17 : vector<8x32xi1>, vector<8x32xf32>
    %c0_8 = arith.constant 0 : index
    %c0_9 = arith.constant 0 : index
    %21 = vector.load %arg4[%c0_8, %c0_9] : memref<8x32xf32, #tpu.memory_space<vmem>>, vector<8x32xf32>
    tpu.vector_store %arg4[%c0_8, %c0_9], %20 {strides = array<i32>} : memref<8x32xf32, #tpu.memory_space<vmem>>, vector<8x32xf32>,
    return
  }
  func.func @transform_0(%arg0: i32) -> (i32, i32) {
    %c0_i32 = arith.constant 0 : i32
    %c0_i32_0 = arith.constant 0 : i32
    return %arg0, %c0_i32 : i32, i32
  }
  func.func @transform_1(%arg0: i32) -> (i32, i32) {
    %c0_i32 = arith.constant 0 : i32
    %c0_i32_0 = arith.constant 0 : i32
    %c0_i32_1 = arith.constant 0 : i32
    return %c0_i32, %c0_i32_0 : i32, i32
  }
  func.func @transform_2(%arg0: i32) -> (i32, i32) {
    %c0_i32 = arith.constant 0 : i32
    %c0_i32_0 = arith.constant 0 : i32
    return %arg0, %c0_i32 : i32, i32
  }
  func.func @transform_3(%arg0: i32) -> (i32, i32) {
    %c0_i32 = arith.constant 0 : i32
    %c0_i32_0 = arith.constant 0 : i32
    return %arg0, %c0_i32 : i32, i32
  }
}

module attributes {stable_mosaic.version = 11 : i64} {
  func.func @_scale_shift_lrelu_kernel(%arg0: i32, %arg1: memref<128x32xf32, #tpu.memory_space<vmem>>, %arg2: memref<1x32xf32, #tpu.memory_space<vmem>>, %arg3: memref<1x32xf32, #tpu.memory_space<vmem>>, %arg4: memref<128x32xf32, #tpu.memory_space<vmem>>) attributes {dimension_semantics = [#tpu.dimension_semantics<parallel>], iteration_bounds = array<i64: 1>, scalar_prefetch = 0 : i64, scratch_operands = 0 : i64, tpu.core_type = #tpu.core_type<tc>, window_params = [{transform_indices = @transform_0, window_bounds = array<i64: 128, 32>}, {pipeline_mode = #tpu.pipeline_mode<synchronous>, transform_indices = @transform_1, window_bounds = array<i64: 1, 32>}, {pipeline_mode = #tpu.pipeline_mode<synchronous>, transform_indices = @transform_2, window_bounds = array<i64: 1, 32>}, {transform_indices = @transform_3, window_bounds = array<i64: 128, 32>}]} {
    %c0 = arith.constant 0 : index
    %c0_0 = arith.constant 0 : index
    %0 = vector.load %arg1[%c0, %c0_0] : memref<128x32xf32, #tpu.memory_space<vmem>>, vector<128x32xf32>
    %c0_1 = arith.constant 0 : index
    %c0_2 = arith.constant 0 : index
    %1 = vector.load %arg2[%c0_1, %c0_2] : memref<1x32xf32, #tpu.memory_space<vmem>>, vector<1x32xf32>
    %2 = vector.broadcast %1 : vector<1x32xf32> to vector<128x32xf32>
    %3 = arith.mulf %0, %2 : vector<128x32xf32>
    %c0_3 = arith.constant 0 : index
    %c0_4 = arith.constant 0 : index
    %4 = vector.load %arg3[%c0_3, %c0_4] : memref<1x32xf32, #tpu.memory_space<vmem>>, vector<1x32xf32>
    %5 = vector.broadcast %4 : vector<1x32xf32> to vector<128x32xf32>
    %6 = arith.addf %3, %5 : vector<128x32xf32>
    %cst = arith.constant 0.000000e+00 : f32
    %7 = vector.broadcast %cst : f32 to vector<128x32xf32>
    %8 = arith.cmpf oge, %6, %7 : vector<128x32xf32>
    %cst_5 = arith.constant 2.000000e-01 : f32
    %9 = vector.broadcast %cst_5 : f32 to vector<128x32xf32>
    %10 = arith.mulf %9, %6 : vector<128x32xf32>
    %11 = arith.select %8, %6, %10 : vector<128x32xi1>, vector<128x32xf32>
    %c0_6 = arith.constant 0 : index
    %c0_7 = arith.constant 0 : index
    %12 = vector.load %arg4[%c0_6, %c0_7] : memref<128x32xf32, #tpu.memory_space<vmem>>, vector<128x32xf32>
    tpu.vector_store %arg4[%c0_6, %c0_7], %11 {strides = array<i32>} : memref<128x32xf32, #tpu.memory_space<vmem>>, vector<128x32xf32>,
    return
  }
  func.func @transform_0(%arg0: i32) -> (i32, i32) {
    %c0_i32 = arith.constant 0 : i32
    %c0_i32_0 = arith.constant 0 : i32
    return %arg0, %c0_i32 : i32, i32
  }
  func.func @transform_1(%arg0: i32) -> (i32, i32) {
    %c0_i32 = arith.constant 0 : i32
    %c0_i32_0 = arith.constant 0 : i32
    %c0_i32_1 = arith.constant 0 : i32
    return %c0_i32, %c0_i32_0 : i32, i32
  }
  func.func @transform_2(%arg0: i32) -> (i32, i32) {
    %c0_i32 = arith.constant 0 : i32
    %c0_i32_0 = arith.constant 0 : i32
    %c0_i32_1 = arith.constant 0 : i32
    return %c0_i32, %c0_i32_0 : i32, i32
  }
  func.func @transform_3(%arg0: i32) -> (i32, i32) {
    %c0_i32 = arith.constant 0 : i32
    %c0_i32_0 = arith.constant 0 : i32
    return %arg0, %c0_i32 : i32, i32
  }
}

module attributes {stable_mosaic.version = 11 : i64} {
  func.func @_mm_stats_kernel(%arg0: i32, %arg1: memref<256x72xbf16, #tpu.memory_space<vmem>>, %arg2: memref<72x16xbf16, #tpu.memory_space<vmem>>, %arg3: memref<256x16xf32, #tpu.memory_space<vmem>>, %arg4: memref<8x16xf32, #tpu.memory_space<vmem>>) attributes {dimension_semantics = [#tpu.dimension_semantics<parallel>], iteration_bounds = array<i64: 2>, scalar_prefetch = 0 : i64, scratch_operands = 0 : i64, tpu.core_type = #tpu.core_type<tc>, window_params = [{transform_indices = @transform_0, window_bounds = array<i64: 256, 72>}, {pipeline_mode = #tpu.pipeline_mode<synchronous>, transform_indices = @transform_1, window_bounds = array<i64: 72, 16>}, {transform_indices = @transform_2, window_bounds = array<i64: 256, 16>}, {transform_indices = @transform_3, window_bounds = array<i64: 8, 16>}]} {
    %c0 = arith.constant 0 : index
    %c0_0 = arith.constant 0 : index
    %0 = vector.load %arg1[%c0, %c0_0] : memref<256x72xbf16, #tpu.memory_space<vmem>>, vector<256x72xbf16>
    %c0_1 = arith.constant 0 : index
    %c0_2 = arith.constant 0 : index
    %1 = vector.load %arg2[%c0_1, %c0_2] : memref<72x16xbf16, #tpu.memory_space<vmem>>, vector<72x16xbf16>
    %cst = arith.constant dense<0.000000e+00> : vector<256x16xf32>
    %2 = tpu.matmul %0, %1, %cst {dimension_numbers = #tpu.dot_dimension_numbers<[1], [0], [0], [1], [0, 0, 1, 1], [], []>} : vector<256x72xbf16>, vector<72x16xbf16>, vector<256x16xf32> -> vector<256x16xf32>
    %c0_3 = arith.constant 0 : index
    %c0_4 = arith.constant 0 : index
    %3 = vector.load %arg3[%c0_3, %c0_4] : memref<256x16xf32, #tpu.memory_space<vmem>>, vector<256x16xf32>
    tpu.vector_store %arg3[%c0_3, %c0_4], %2 {strides = array<i32>} : memref<256x16xf32, #tpu.memory_space<vmem>>, vector<256x16xf32>,
    %cst_5 = arith.constant dense<0.000000e+00> : vector<16xf32>
    %4 = vector.multi_reduction <add>, %2, %cst_5 [0] : vector<256x16xf32> to vector<16xf32>
    %5 = vector.shape_cast %4 : vector<16xf32> to vector<1x16xf32>
    %6 = arith.mulf %2, %2 : vector<256x16xf32>
    %cst_6 = arith.constant dense<0.000000e+00> : vector<16xf32>
    %7 = vector.multi_reduction <add>, %6, %cst_6 [0] : vector<256x16xf32> to vector<16xf32>
    %8 = vector.shape_cast %7 : vector<16xf32> to vector<1x16xf32>
    %9 = tpu.iota {dimensions = array<i32: 0>} : vector<8x16xi32>
    %c0_i32 = arith.constant 0 : i32
    %10 = vector.broadcast %c0_i32 : i32 to vector<8x16xi32>
    %11 = arith.cmpi eq, %9, %10 : vector<8x16xi32>
    %c1_i32 = arith.constant 1 : i32
    %12 = vector.broadcast %c1_i32 : i32 to vector<8x16xi32>
    %13 = arith.cmpi eq, %9, %12 : vector<8x16xi32>
    %cst_7 = arith.constant 0.000000e+00 : f32
    %14 = vector.shape_cast %8 : vector<1x16xf32> to vector<1x16xf32>
    %15 = vector.broadcast %14 : vector<1x16xf32> to vector<8x16xf32>
    %16 = vector.broadcast %cst_7 : f32 to vector<8x16xf32>
    %17 = arith.select %13, %15, %16 : vector<8x16xi1>, vector<8x16xf32>
    %18 = vector.shape_cast %5 : vector<1x16xf32> to vector<1x16xf32>
    %19 = vector.broadcast %18 : vector<1x16xf32> to vector<8x16xf32>
    %20 = arith.select %11, %19, %17 : vector<8x16xi1>, vector<8x16xf32>
    %c0_8 = arith.constant 0 : index
    %c0_9 = arith.constant 0 : index
    %21 = vector.load %arg4[%c0_8, %c0_9] : memref<8x16xf32, #tpu.memory_space<vmem>>, vector<8x16xf32>
    tpu.vector_store %arg4[%c0_8, %c0_9], %20 {strides = array<i32>} : memref<8x16xf32, #tpu.memory_space<vmem>>, vector<8x16xf32>,
    return
  }
  func.func @transform_0(%arg0: i32) -> (i32, i32) {
    %c0_i32 = arith.constant 0 : i32
    %c0_i32_0 = arith.constant 0 : i32
    return %arg0, %c0_i32 : i32, i32
  }
  func.func @transform_1(%arg0: i32) -> (i32, i32) {
    %c0_i32 = arith.constant 0 : i32
    %c0_i32_0 = arith.constant 0 : i32
    %c0_i32_1 = arith.constant 0 : i32
    return %c0_i32, %c0_i32_0 : i32, i32
  }
  func.func @transform_2(%arg0: i32) -> (i32, i32) {
    %c0_i32 = arith.constant 0 : i32
    %c0_i32_0 = arith.constant 0 : i32
    return %arg0, %c0_i32 : i32, i32
  }
  func.func @transform_3(%arg0: i32) -> (i32, i32) {
    %c0_i32 = arith.constant 0 : i32
    %c0_i32_0 = arith.constant 0 : i32
    return %arg0, %c0_i32 : i32, i32
  }
}

module attributes {stable_mosaic.version = 11 : i64} {
  func.func @_mm_stats_kernel(%arg0: i32, %arg1: memref<128x16xbf16, #tpu.memory_space<vmem>>, %arg2: memref<16x64xbf16, #tpu.memory_space<vmem>>, %arg3: memref<128x64xf32, #tpu.memory_space<vmem>>, %arg4: memref<8x64xf32, #tpu.memory_space<vmem>>) attributes {dimension_semantics = [#tpu.dimension_semantics<parallel>], iteration_bounds = array<i64: 1>, scalar_prefetch = 0 : i64, scratch_operands = 0 : i64, tpu.core_type = #tpu.core_type<tc>, window_params = [{transform_indices = @transform_0, window_bounds = array<i64: 128, 16>}, {pipeline_mode = #tpu.pipeline_mode<synchronous>, transform_indices = @transform_1, window_bounds = array<i64: 16, 64>}, {transform_indices = @transform_2, window_bounds = array<i64: 128, 64>}, {transform_indices = @transform_3, window_bounds = array<i64: 8, 64>}]} {
    %c0 = arith.constant 0 : index
    %c0_0 = arith.constant 0 : index
    %0 = vector.load %arg1[%c0, %c0_0] : memref<128x16xbf16, #tpu.memory_space<vmem>>, vector<128x16xbf16>
    %c0_1 = arith.constant 0 : index
    %c0_2 = arith.constant 0 : index
    %1 = vector.load %arg2[%c0_1, %c0_2] : memref<16x64xbf16, #tpu.memory_space<vmem>>, vector<16x64xbf16>
    %cst = arith.constant dense<0.000000e+00> : vector<128x64xf32>
    %2 = tpu.matmul %0, %1, %cst {dimension_numbers = #tpu.dot_dimension_numbers<[1], [0], [0], [1], [0, 0, 1, 1], [], []>} : vector<128x16xbf16>, vector<16x64xbf16>, vector<128x64xf32> -> vector<128x64xf32>
    %c0_3 = arith.constant 0 : index
    %c0_4 = arith.constant 0 : index
    %3 = vector.load %arg3[%c0_3, %c0_4] : memref<128x64xf32, #tpu.memory_space<vmem>>, vector<128x64xf32>
    tpu.vector_store %arg3[%c0_3, %c0_4], %2 {strides = array<i32>} : memref<128x64xf32, #tpu.memory_space<vmem>>, vector<128x64xf32>,
    %cst_5 = arith.constant dense<0.000000e+00> : vector<64xf32>
    %4 = vector.multi_reduction <add>, %2, %cst_5 [0] : vector<128x64xf32> to vector<64xf32>
    %5 = vector.shape_cast %4 : vector<64xf32> to vector<1x64xf32>
    %6 = arith.mulf %2, %2 : vector<128x64xf32>
    %cst_6 = arith.constant dense<0.000000e+00> : vector<64xf32>
    %7 = vector.multi_reduction <add>, %6, %cst_6 [0] : vector<128x64xf32> to vector<64xf32>
    %8 = vector.shape_cast %7 : vector<64xf32> to vector<1x64xf32>
    %9 = tpu.iota {dimensions = array<i32: 0>} : vector<8x64xi32>
    %c0_i32 = arith.constant 0 : i32
    %10 = vector.broadcast %c0_i32 : i32 to vector<8x64xi32>
    %11 = arith.cmpi eq, %9, %10 : vector<8x64xi32>
    %c1_i32 = arith.constant 1 : i32
    %12 = vector.broadcast %c1_i32 : i32 to vector<8x64xi32>
    %13 = arith.cmpi eq, %9, %12 : vector<8x64xi32>
    %cst_7 = arith.constant 0.000000e+00 : f32
    %14 = vector.shape_cast %8 : vector<1x64xf32> to vector<1x64xf32>
    %15 = vector.broadcast %14 : vector<1x64xf32> to vector<8x64xf32>
    %16 = vector.broadcast %cst_7 : f32 to vector<8x64xf32>
    %17 = arith.select %13, %15, %16 : vector<8x64xi1>, vector<8x64xf32>
    %18 = vector.shape_cast %5 : vector<1x64xf32> to vector<1x64xf32>
    %19 = vector.broadcast %18 : vector<1x64xf32> to vector<8x64xf32>
    %20 = arith.select %11, %19, %17 : vector<8x64xi1>, vector<8x64xf32>
    %c0_8 = arith.constant 0 : index
    %c0_9 = arith.constant 0 : index
    %21 = vector.load %arg4[%c0_8, %c0_9] : memref<8x64xf32, #tpu.memory_space<vmem>>, vector<8x64xf32>
    tpu.vector_store %arg4[%c0_8, %c0_9], %20 {strides = array<i32>} : memref<8x64xf32, #tpu.memory_space<vmem>>, vector<8x64xf32>,
    return
  }
  func.func @transform_0(%arg0: i32) -> (i32, i32) {
    %c0_i32 = arith.constant 0 : i32
    %c0_i32_0 = arith.constant 0 : i32
    return %arg0, %c0_i32 : i32, i32
  }
  func.func @transform_1(%arg0: i32) -> (i32, i32) {
    %c0_i32 = arith.constant 0 : i32
    %c0_i32_0 = arith.constant 0 : i32
    %c0_i32_1 = arith.constant 0 : i32
    return %c0_i32, %c0_i32_0 : i32, i32
  }
  func.func @transform_2(%arg0: i32) -> (i32, i32) {
    %c0_i32 = arith.constant 0 : i32
    %c0_i32_0 = arith.constant 0 : i32
    return %arg0, %c0_i32 : i32, i32
  }
  func.func @transform_3(%arg0: i32) -> (i32, i32) {
    %c0_i32 = arith.constant 0 : i32
    %c0_i32_0 = arith.constant 0 : i32
    return %arg0, %c0_i32 : i32, i32
  }
}

module attributes {stable_mosaic.version = 11 : i64} {
  func.func @_dual_scale_add_lrelu_kernel(%arg0: i32, %arg1: memref<128x64xf32, #tpu.memory_space<vmem>>, %arg2: memref<1x64xf32, #tpu.memory_space<vmem>>, %arg3: memref<1x64xf32, #tpu.memory_space<vmem>>, %arg4: memref<128x64xf32, #tpu.memory_space<vmem>>, %arg5: memref<1x64xf32, #tpu.memory_space<vmem>>, %arg6: memref<1x64xf32, #tpu.memory_space<vmem>>, %arg7: memref<128x64xf32, #tpu.memory_space<vmem>>) attributes {dimension_semantics = [#tpu.dimension_semantics<parallel>], iteration_bounds = array<i64: 1>, scalar_prefetch = 0 : i64, scratch_operands = 0 : i64, tpu.core_type = #tpu.core_type<tc>, window_params = [{transform_indices = @transform_0, window_bounds = array<i64: 128, 64>}, {pipeline_mode = #tpu.pipeline_mode<synchronous>, transform_indices = @transform_1, window_bounds = array<i64: 1, 64>}, {pipeline_mode = #tpu.pipeline_mode<synchronous>, transform_indices = @transform_2, window_bounds = array<i64: 1, 64>}, {transform_indices = @transform_3, window_bounds = array<i64: 128, 64>}, {pipeline_mode = #tpu.pipeline_mode<synchronous>, transform_indices = @transform_4, window_bounds = array<i64: 1, 64>}, {pipeline_mode = #tpu.pipeline_mode<synchronous>, transform_indices = @transform_5, window_bounds = array<i64: 1, 64>}, {transform_indices = @transform_6, window_bounds = array<i64: 128, 64>}]} {
    %c0 = arith.constant 0 : index
    %c0_0 = arith.constant 0 : index
    %0 = vector.load %arg1[%c0, %c0_0] : memref<128x64xf32, #tpu.memory_space<vmem>>, vector<128x64xf32>
    %c0_1 = arith.constant 0 : index
    %c0_2 = arith.constant 0 : index
    %1 = vector.load %arg2[%c0_1, %c0_2] : memref<1x64xf32, #tpu.memory_space<vmem>>, vector<1x64xf32>
    %2 = vector.broadcast %1 : vector<1x64xf32> to vector<128x64xf32>
    %3 = arith.mulf %0, %2 : vector<128x64xf32>
    %c0_3 = arith.constant 0 : index
    %c0_4 = arith.constant 0 : index
    %4 = vector.load %arg3[%c0_3, %c0_4] : memref<1x64xf32, #tpu.memory_space<vmem>>, vector<1x64xf32>
    %5 = vector.broadcast %4 : vector<1x64xf32> to vector<128x64xf32>
    %6 = arith.addf %3, %5 : vector<128x64xf32>
    %c0_5 = arith.constant 0 : index
    %c0_6 = arith.constant 0 : index
    %7 = vector.load %arg4[%c0_5, %c0_6] : memref<128x64xf32, #tpu.memory_space<vmem>>, vector<128x64xf32>
    %c0_7 = arith.constant 0 : index
    %c0_8 = arith.constant 0 : index
    %8 = vector.load %arg5[%c0_7, %c0_8] : memref<1x64xf32, #tpu.memory_space<vmem>>, vector<1x64xf32>
    %9 = vector.broadcast %8 : vector<1x64xf32> to vector<128x64xf32>
    %10 = arith.mulf %7, %9 : vector<128x64xf32>
    %11 = arith.addf %6, %10 : vector<128x64xf32>
    %c0_9 = arith.constant 0 : index
    %c0_10 = arith.constant 0 : index
    %12 = vector.load %arg6[%c0_9, %c0_10] : memref<1x64xf32, #tpu.memory_space<vmem>>, vector<1x64xf32>
    %13 = vector.broadcast %12 : vector<1x64xf32> to vector<128x64xf32>
    %14 = arith.addf %11, %13 : vector<128x64xf32>
    %cst = arith.constant 0.000000e+00 : f32
    %15 = vector.broadcast %cst : f32 to vector<128x64xf32>
    %16 = arith.cmpf oge, %14, %15 : vector<128x64xf32>
    %cst_11 = arith.constant 2.000000e-01 : f32
    %17 = vector.broadcast %cst_11 : f32 to vector<128x64xf32>
    %18 = arith.mulf %17, %14 : vector<128x64xf32>
    %19 = arith.select %16, %14, %18 : vector<128x64xi1>, vector<128x64xf32>
    %c0_12 = arith.constant 0 : index
    %c0_13 = arith.constant 0 : index
    %20 = vector.load %arg7[%c0_12, %c0_13] : memref<128x64xf32, #tpu.memory_space<vmem>>, vector<128x64xf32>
    tpu.vector_store %arg7[%c0_12, %c0_13], %19 {strides = array<i32>} : memref<128x64xf32, #tpu.memory_space<vmem>>, vector<128x64xf32>,
    return
  }
  func.func @transform_0(%arg0: i32) -> (i32, i32) {
    %c0_i32 = arith.constant 0 : i32
    %c0_i32_0 = arith.constant 0 : i32
    return %arg0, %c0_i32 : i32, i32
  }
  func.func @transform_1(%arg0: i32) -> (i32, i32) {
    %c0_i32 = arith.constant 0 : i32
    %c0_i32_0 = arith.constant 0 : i32
    %c0_i32_1 = arith.constant 0 : i32
    return %c0_i32, %c0_i32_0 : i32, i32
  }
  func.func @transform_2(%arg0: i32) -> (i32, i32) {
    %c0_i32 = arith.constant 0 : i32
    %c0_i32_0 = arith.constant 0 : i32
    %c0_i32_1 = arith.constant 0 : i32
    return %c0_i32, %c0_i32_0 : i32, i32
  }
  func.func @transform_3(%arg0: i32) -> (i32, i32) {
    %c0_i32 = arith.constant 0 : i32
    %c0_i32_0 = arith.constant 0 : i32
    return %arg0, %c0_i32 : i32, i32
  }
  func.func @transform_4(%arg0: i32) -> (i32, i32) {
    %c0_i32 = arith.constant 0 : i32
    %c0_i32_0 = arith.constant 0 : i32
    %c0_i32_1 = arith.constant 0 : i32
    return %c0_i32, %c0_i32_0 : i32, i32
  }
  func.func @transform_5(%arg0: i32) -> (i32, i32) {
    %c0_i32 = arith.constant 0 : i32
    %c0_i32_0 = arith.constant 0 : i32
    %c0_i32_1 = arith.constant 0 : i32
    return %c0_i32, %c0_i32_0 : i32, i32
  }
  func.func @transform_6(%arg0: i32) -> (i32, i32) {
    %c0_i32 = arith.constant 0 : i32
    %c0_i32_0 = arith.constant 0 : i32
    return %arg0, %c0_i32 : i32, i32
  }
}

</mosaic_0001>

<llo_original>
// kernel: tile.33
$region0: #{tile.33}
  #allocation0 [shape = 's32[1]{0}', space=sflag, size = 0x4, scoped, tag = 'scoped memory for tile.33']
  %s0 = inlined_call_operand.vmem [shape: f32[8], index: 0, kind: input, shape index: {}]
  %s1 = inlined_call_operand.vmem [shape: f32[4,8], index: 1, kind: output, shape index: {}]
  // Predicated region
  $region2: #{tile.33} parent=0 // pred_check
    _
  $region3: #{tile.33} parent=0 // pred_check_branch
    %3 = sbr.rel (0) target = $region5
  $region4: #{tile.33} parent=0 // pred_region
    _
  $region5: #{tile.33} parent=0 // pred_fallthru
    _
  %v4 = vld [vmem:[%s0] ss:$0 sm:$0xff]
  %5 = vst [vmem:[%s1] sm:$0xf] %v4

// kernel: tile.38
$region0: #{tile.38}
  %s0 = inlined_call_operand.vmem [shape: f32[4,8], index: 0, kind: input, shape index: {}]
  %s1 = inlined_call_operand.vmem [shape: f32[1,32], index: 1, kind: output, shape index: {}]
  $region1: #{tile.38} parent=0
    #allocation0 [shape = 'u8[4096]{0}', space=vmem, size = 0x1000, scoped, tag = 'scoped mem for output reshape']
    #allocation1 [shape = 'u8[4096]{0}', space=vmem, size = 0x1000, scoped, tag = 'scoped mem for input reshape']
    %s3 = sshllo.u32 0, 4
    %v4 = vld [vmem:[%s0] sm:%s3]
    %5 = vst [vmem:[#allocation1] sm:%s3] %v4
    %v6 = vld [vmem:[#allocation1] sm:$0x1]
    %vm7 = vcmask 64512
    %8 = vst.msk [vmem:[#allocation0] sm:$0x1] %vm7, %v6
    %s9 = scalar_lea.vmem [#allocation1], 3
    %v10 = vld [vmem:[%s9] sm:$0x1]
    %11 = vrot.lane.b32.xlu0 %v10, 24
    %v12 = vpop.permute.xlu0 %11
    %vm13 = vcmask 261312
    %14 = vst.msk [vmem:[#allocation0] sm:$0x1] %vm13, %v12
    %s15 = scalar_lea.vmem [#allocation1], 2
    %v16 = vld [vmem:[%s15] sm:$0x1]
    %17 = vrot.lane.b32.xlu0 %v16, 16
    %v18 = vpop.permute.xlu0 %17
    %vm19 = vcmask 195712
    %20 = vst.msk [vmem:[#allocation0] sm:$0x1] %vm19, %v18
    %s21 = scalar_lea.vmem [#allocation1], 1
    %v22 = vld [vmem:[%s21] sm:$0x1]
    %23 = vrot.lane.b32.xlu0 %v22, 8
    %v24 = vpop.permute.xlu0 %23
    %vm25 = vcmask 130112
    %26 = vst.msk [vmem:[#allocation0] sm:$0x1] %vm25, %v24
    %s28 = sshllo.u32 0, 1
    %v30 = vld [vmem:[#allocation0] sm:%s28]
    %s31 = sshllo.u32 0, 1
    %32 = vst [vmem:[%s1] sm:%s31] %v30

// kernel: res_trans_block.5
$region0: #{res_trans_block.5}
  #allocation0 [shape = 'u32[]', space=smem, size = 0x4, offset = 0x4, fixed_abs, tag = 'smem constant byte address 0x4 - core index']
  #allocation1 [shape = 'u32[144,128]{1,0:T(1,128)}', space=vmem, size = 0x12000, scoped, tag = 'internal scratch']
  %s0 = inlined_call_operand.vmem [shape: bf16[128,144], index: 0, kind: input, shape index: {}]
  %s1 = inlined_call_operand.vmem [shape: bf16[144,32], index: 1, kind: input, shape index: {}]
  %s2 = inlined_call_operand.vmem [shape: f32[128,32], index: 2, kind: output, shape index: {0}]
  %s3 = inlined_call_operand.vmem [shape: f32[8,32], index: 3, kind: output, shape index: {1}]
  %4 = xla_tuple %s2, %s3
  %s5 = sld [smem:[#allocation0]]
  $region26: #{res_trans_block.5} parent=0
    _
  %s7 = ssub.s32 1, %s5
  %s8 = scalar_select 0, %s7, %s5
  // Predicated region
  $region2: #{res_trans_block.5} parent=0 // pred_check
    _
  $region3: #{res_trans_block.5} parent=0 // pred_check_branch
    %10 = sbr.rel (0) target = $region5
  $region4: #{res_trans_block.5} parent=0 // pred_region
    _
  $region5: #{res_trans_block.5} parent=0 // pred_fallthru
    _
  // Predicated region
  $region6: #{res_trans_block.5} parent=0 // pred_check
    _
  $region7: #{res_trans_block.5} parent=0 // pred_check_branch
    %12 = sbr.rel (0) target = $region9
  $region8: #{res_trans_block.5} parent=0 // pred_region
    _
  $region9: #{res_trans_block.5} parent=0 // pred_fallthru
    _
  %v14 = vld [vmem:[%s0] sm:$0xff]
  %v15 = vld [vmem:[%s0 + $0x8] sm:$0xff]
  %v16 = vld [vmem:[%s0 + $0x10] sm:$0xff]
  %v17 = vld [vmem:[%s0 + $0x18] sm:$0xff]
  %v18 = vld [vmem:[%s0 + $0x20] sm:$0xff]
  %v19 = vld [vmem:[%s0 + $0x28] sm:$0xff]
  %v20 = vld [vmem:[%s0 + $0x30] sm:$0xff]
  %v21 = vld [vmem:[%s0 + $0x38] sm:$0xff]
  %v22 = vld [vmem:[%s0 + $0x40] sm:$0xff]
  %v23 = vld [vmem:[%s0 + $0x48] sm:$0xff]
  %v24 = vld [vmem:[%s0 + $0x50] sm:$0xff]
  %v25 = vld [vmem:[%s0 + $0x58] sm:$0xff]
  %v26 = vld [vmem:[%s0 + $0x60] sm:$0xff]
  %v27 = vld [vmem:[%s0 + $0x68] sm:$0xff]
  %v28 = vld [vmem:[%s0 + $0x70] sm:$0xff]
  %v29 = vld [vmem:[%s0 + $0x78] sm:$0xff]
  %v30 = vld [vmem:[%s1] sm:$0xf]
  %v31 = vld [vmem:[%s1 + $0x4] sm:$0xf]
  %v32 = vld [vmem:[%s1 + $0x8] sm:$0xf]
  %v33 = vld [vmem:[%s1 + $0xc] sm:$0xf]
  %v34 = vld [vmem:[%s1 + $0x10] sm:$0xf]
  %v35 = vld [vmem:[%s1 + $0x14] sm:$0xf]
  %v36 = vld [vmem:[%s1 + $0x18] sm:$0xf]
  %v37 = vld [vmem:[%s1 + $0x1c] sm:$0xf]
  %v38 = vld [vmem:[%s1 + $0x20] sm:$0xf]
  %v39 = vld [vmem:[%s1 + $0x24] sm:$0xf]
  %v40 = vld [vmem:[%s1 + $0x28] sm:$0xf]
  %v41 = vld [vmem:[%s1 + $0x2c] sm:$0xf]
  %v42 = vld [vmem:[%s1 + $0x30] sm:$0xf]
  %v43 = vld [vmem:[%s1 + $0x34] sm:$0xf]
  %v44 = vld [vmem:[%s1 + $0x38] sm:$0xf]
  %v45 = vld [vmem:[%s1 + $0x3c] sm:$0xf]
  %v46 = vld [vmem:[%s1 + $0x40] sm:$0xf]
  %v47 = vld [vmem:[%s1 + $0x44] sm:$0xf]
  %v64 = vunpack.c.l.b16 %v14
  %v65 = vunpack.c.h.b16 %v14
  %v66 = vunpack.c.l.b16 %v15
  %v67 = vunpack.c.h.b16 %v15
  %v68 = vunpack.c.l.b16 %v16
  %v69 = vunpack.c.h.b16 %v16
  %v70 = vunpack.c.l.b16 %v17
  %v71 = vunpack.c.h.b16 %v17
  %v72 = vunpack.c.l.b16 %v18
  %v73 = vunpack.c.h.b16 %v18
  %v74 = vunpack.c.l.b16 %v19
  %v75 = vunpack.c.h.b16 %v19
  %v76 = vunpack.c.l.b16 %v20
  %v77 = vunpack.c.h.b16 %v20
  %v78 = vunpack.c.l.b16 %v21
  %v79 = vunpack.c.h.b16 %v21
  %v80 = vunpack.c.l.b16 %v22
  %v81 = vunpack.c.h.b16 %v22
  %v82 = vunpack.c.l.b16 %v23
  %v83 = vunpack.c.h.b16 %v23
  %v84 = vunpack.c.l.b16 %v24
  %v85 = vunpack.c.h.b16 %v24
  %v86 = vunpack.c.l.b16 %v25
  %v87 = vunpack.c.h.b16 %v25
  %v88 = vunpack.c.l.b16 %v26
  %v89 = vunpack.c.h.b16 %v26
  %v90 = vunpack.c.l.b16 %v27
  %v91 = vunpack.c.h.b16 %v27
  %v92 = vunpack.c.l.b16 %v28
  %v93 = vunpack.c.h.b16 %v28
  %v94 = vunpack.c.l.b16 %v29
  %v95 = vunpack.c.h.b16 %v29
  %v96 = vpack.c.b16 %v66, %v64
  %v97 = vpack.c.b16 %v67, %v65
  %v98 = vpack.c.b16 %v70, %v68
  %v99 = vpack.c.b16 %v71, %v69
  %v100 = vpack.c.b16 %v74, %v72
  %v101 = vpack.c.b16 %v75, %v73
  %v102 = vpack.c.b16 %v78, %v76
  %v103 = vpack.c.b16 %v79, %v77
  %v104 = vpack.c.b16 %v82, %v80
  %v105 = vpack.c.b16 %v83, %v81
  %v106 = vpack.c.b16 %v86, %v84
  %v107 = vpack.c.b16 %v87, %v85
  %v108 = vpack.c.b16 %v90, %v88
  %v109 = vpack.c.b16 %v91, %v89
  %v110 = vpack.c.b16 %v94, %v92
  %v111 = vpack.c.b16 %v95, %v93
  %v138 = vunpack.c.l.b16 %v30
  %v139 = vunpack.c.l.b16 %v31
  %v140 = vunpack.c.l.b16 %v32
  %v141 = vunpack.c.l.b16 %v33
  %v142 = vunpack.c.l.b16 %v34
  %v143 = vunpack.c.l.b16 %v35
  %v144 = vunpack.c.l.b16 %v36
  %v145 = vunpack.c.l.b16 %v37
  %v146 = vunpack.c.l.b16 %v38
  %v147 = vunpack.c.l.b16 %v39
  %v148 = vunpack.c.l.b16 %v40
  %v149 = vunpack.c.l.b16 %v41
  %v150 = vunpack.c.l.b16 %v42
  %v151 = vunpack.c.l.b16 %v43
  %v152 = vunpack.c.l.b16 %v44
  %v153 = vunpack.c.l.b16 %v45
  %v154 = vunpack.c.l.b16 %v46
  %v155 = vunpack.c.l.b16 %v47
  %v156 = vpack.c.b16 %v139, %v138
  %v157 = vpack.c.b16 %v141, %v140
  %v158 = vpack.c.b16 %v143, %v142
  %v159 = vpack.c.b16 %v145, %v144
  %v160 = vpack.c.b16 %v147, %v146
  %v161 = vpack.c.b16 %v149, %v148
  %v162 = vpack.c.b16 %v151, %v150
  %v163 = vpack.c.b16 %v153, %v152
  %v164 = vpack.c.b16 %v155, %v154
  %vm174 = vcmask 130048
  %v176 = vsel %vm174, %v97, 0
  %v179 = vsel %vm174, %v99, 0
  %v182 = vsel %vm174, %v101, 0
  %v185 = vsel %vm174, %v103, 0
  %v188 = vsel %vm174, %v105, 0
  %v191 = vsel %vm174, %v107, 0
  %v194 = vsel %vm174, %v109, 0
  %v197 = vsel %vm174, %v111, 0
  %199 = vmatprep.subr.bf16.mxu0 0
  %200 = vmatpush1.bf16.msra.mxu0 %v156
  %201 = vmatprep.subr.bf16.mxu0 0
  %202 = vmatpush1.bf16.msra.mxu0 %v157
  %203 = vmatprep.subr.bf16.mxu0 0
  %204 = vmatpush1.bf16.msra.mxu0 %v158
  %205 = vmatprep.subr.bf16.mxu0 0
  %206 = vmatpush1.bf16.msra.mxu0 %v159
  %207 = vmatprep.subr.bf16.mxu0 0
  %208 = vmatpush1.bf16.msra.mxu0 %v160
  %209 = vmatprep.subr.bf16.mxu0 0
  %210 = vmatpush1.bf16.msra.mxu0 %v161
  %211 = vmatprep.subr.bf16.mxu0 0
  %212 = vmatpush1.bf16.msra.mxu0 %v162
  %213 = vmatprep.subr.bf16.mxu0 0
  %214 = vmatpush1.bf16.msra.mxu0 %v163
  %215 = vmatprep.subr.bf16.mxu0 0
  %216 = vmatpush1.bf16.msra.mxu0 %v164
  %217 = vmatprep.subr.bf16.mxu0 0
  %218 = vmatpush1.bf16.msra.mxu0 0
  %219 = vmatprep.subr.bf16.mxu0 0
  %220 = vmatpush1.bf16.msra.mxu0 0
  %221 = vmatprep.subr.bf16.mxu0 0
  %222 = vmatpush1.bf16.msra.mxu0 0
  %223 = vmatprep.subr.bf16.mxu0 0
  %224 = vmatpush1.bf16.msra.mxu0 0
  %225 = vmatprep.subr.bf16.mxu0 0
  %226 = vmatpush1.bf16.msra.mxu0 0
  %227 = vmatprep.subr.bf16.mxu0 0
  %228 = vmatpush1.bf16.msra.mxu0 0
  %229 = vmatprep.subr.bf16.mxu0 0
  %230 = vmatpush1.bf16.msra.mxu0 0
  %231 = vmatprep.mubr.bf16.mxu0 %v176
  %232 = vmatmul.mubr.bf16.gmra.mrb[0].mxu0 %v96
  %v233 = vpop.f32.mrb[0].mxu0
  %v234 = vadd.f32 0.0, %v233
  %v235 = vpop.f32.mrb[0].mxu0
  %v236 = vpop.f32.mrb[0].mxu0
  %v237 = vadd.f32 0.0, %v236
  %v238 = vpop.f32.mrb[0].mxu0
  %239 = vmatprep.mubr.bf16.mxu0 %v179
  %240 = vmatmul.mubr.bf16.gmra.mrb[0].mxu0 %v98
  %v241 = vpop.f32.mrb[0].mxu0
  %v242 = vadd.f32 0.0, %v241
  %v243 = vpop.f32.mrb[0].mxu0
  %v244 = vpop.f32.mrb[0].mxu0
  %v245 = vadd.f32 0.0, %v244
  %v246 = vpop.f32.mrb[0].mxu0
  %247 = vmatprep.mubr.bf16.mxu0 %v182
  %248 = vmatmul.mubr.bf16.gmra.mrb[0].mxu0 %v100
  %v249 = vpop.f32.mrb[0].mxu0
  %v250 = vadd.f32 0.0, %v249
  %v251 = vpop.f32.mrb[0].mxu0
  %v252 = vpop.f32.mrb[0].mxu0
  %v253 = vadd.f32 0.0, %v252
  %v254 = vpop.f32.mrb[0].mxu0
  %255 = vmatprep.mubr.bf16.mxu0 %v185
  %256 = vmatmul.mubr.bf16.gmra.mrb[0].mxu0 %v102
  %v257 = vpop.f32.mrb[0].mxu0
  %v258 = vadd.f32 0.0, %v257
  %v259 = vpop.f32.mrb[0].mxu0
  %v260 = vpop.f32.mrb[0].mxu0
  %v261 = vadd.f32 0.0, %v260
  %v262 = vpop.f32.mrb[0].mxu0
  %263 = vmatprep.mubr.bf16.mxu0 %v188
  %264 = vmatmul.mubr.bf16.gmra.mrb[0].mxu0 %v104
  %v265 = vpop.f32.mrb[0].mxu0
  %v266 = vadd.f32 0.0, %v265
  %v267 = vpop.f32.mrb[0].mxu0
  %v268 = vpop.f32.mrb[0].mxu0
  %v269 = vadd.f32 0.0, %v268
  %v270 = vpop.f32.mrb[0].mxu0
  %271 = vmatprep.mubr.bf16.mxu0 %v191
  %272 = vmatmul.mubr.bf16.gmra.mrb[0].mxu0 %v106
  %v273 = vpop.f32.mrb[0].mxu0
  %v274 = vadd.f32 0.0, %v273
  %v275 = vpop.f32.mrb[0].mxu0
  %v276 = vpop.f32.mrb[0].mxu0
  %v277 = vadd.f32 0.0, %v276
  %v278 = vpop.f32.mrb[0].mxu0
  %279 = vmatprep.mubr.bf16.mxu0 %v194
  %280 = vmatmul.mubr.bf16.gmra.mrb[0].mxu0 %v108
  %v281 = vpop.f32.mrb[0].mxu0
  %v282 = vadd.f32 0.0, %v281
  %v283 = vpop.f32.mrb[0].mxu0
  %v284 = vpop.f32.mrb[0].mxu0
  %v285 = vadd.f32 0.0, %v284
  %v286 = vpop.f32.mrb[0].mxu0
  %287 = vmatprep.mubr.bf16.mxu0 %v197
  %288 = vmatmul.mubr.bf16.gmra.mrb[0].mxu0 %v110
  %v289 = vpop.f32.mrb[0].mxu0
  %v290 = vadd.f32 0.0, %v289
  %v291 = vpop.f32.mrb[0].mxu0
  %v292 = vpop.f32.mrb[0].mxu0
  %v293 = vadd.f32 0.0, %v292
  %v294 = vpop.f32.mrb[0].mxu0
  %295 = vdwg.mxu0
  %vm296 = vcmask 261120
  %297 = vst.msk [vmem:[%s2] sm:$0xff] %vm296, %v234
  %298 = vst.msk [vmem:[%s2 + $0x8] sm:$0xff] %vm296, %v237
  %299 = vst.msk [vmem:[%s2 + $0x10] sm:$0xff] %vm296, %v242
  %300 = vst.msk [vmem:[%s2 + $0x18] sm:$0xff] %vm296, %v245
  %301 = vst.msk [vmem:[%s2 + $0x20] sm:$0xff] %vm296, %v250
  %302 = vst.msk [vmem:[%s2 + $0x28] sm:$0xff] %vm296, %v253
  %303 = vst.msk [vmem:[%s2 + $0x30] sm:$0xff] %vm296, %v258
  %304 = vst.msk [vmem:[%s2 + $0x38] sm:$0xff] %vm296, %v261
  %305 = vst.msk [vmem:[%s2 + $0x40] sm:$0xff] %vm296, %v266
  %306 = vst.msk [vmem:[%s2 + $0x48] sm:$0xff] %vm296, %v269
  %307 = vst.msk [vmem:[%s2 + $0x50] sm:$0xff] %vm296, %v274
  %308 = vst.msk [vmem:[%s2 + $0x58] sm:$0xff] %vm296, %v277
  %309 = vst.msk [vmem:[%s2 + $0x60] sm:$0xff] %vm296, %v282
  %310 = vst.msk [vmem:[%s2 + $0x68] sm:$0xff] %vm296, %v285
  %311 = vst.msk [vmem:[%s2 + $0x70] sm:$0xff] %vm296, %v290
  %312 = vst.msk [vmem:[%s2 + $0x78] sm:$0xff] %vm296, %v293
  %v313 = vsel %vm296, %v234, 0.0
  %v314 = vsel %vm296, %v237, 0.0
  %v315 = vadd.f32 %v313, %v314
  %v316 = vsel %vm296, %v242, 0.0
  %v317 = vadd.f32 %v315, %v316
  %v318 = vsel %vm296, %v245, 0.0
  %v319 = vadd.f32 %v317, %v318
  %v320 = vsel %vm296, %v250, 0.0
  %v321 = vadd.f32 %v319, %v320
  %v322 = vsel %vm296, %v253, 0.0
  %v323 = vadd.f32 %v321, %v322
  %v324 = vsel %vm296, %v258, 0.0
  %v325 = vadd.f32 %v323, %v324
  %v326 = vsel %vm296, %v261, 0.0
  %v327 = vadd.f32 %v325, %v326
  %v328 = vsel %vm296, %v266, 0.0
  %v329 = vadd.f32 %v327, %v328
  %v330 = vsel %vm296, %v269, 0.0
  %v331 = vadd.f32 %v329, %v330
  %v332 = vsel %vm296, %v274, 0.0
  %v333 = vadd.f32 %v331, %v332
  %v334 = vsel %vm296, %v277, 0.0
  %v335 = vadd.f32 %v333, %v334
  %v336 = vsel %vm296, %v282, 0.0
  %v337 = vadd.f32 %v335, %v336
  %v338 = vsel %vm296, %v285, 0.0
  %v339 = vadd.f32 %v337, %v338
  %v340 = vsel %vm296, %v290, 0.0
  %v341 = vadd.f32 %v339, %v340
  %v342 = vsel %vm296, %v293, 0.0
  %v343 = vadd.f32 %v341, %v342
  %v344 = vrot.slane %v343, 4
  %v345 = vadd.f32 %v343, %v344
  %v346 = vrot.slane %v345, 2
  %v347 = vadd.f32 %v345, %v346
  %v348 = vrot.slane %v347, 1
  %v349 = vadd.f32 %v347, %v348
  %v350 = vmul.f32 %v234, %v234
  %v351 = vmul.f32 %v237, %v237
  %v352 = vmul.f32 %v242, %v242
  %v353 = vmul.f32 %v245, %v245
  %v354 = vmul.f32 %v250, %v250
  %v355 = vmul.f32 %v253, %v253
  %v356 = vmul.f32 %v258, %v258
  %v357 = vmul.f32 %v261, %v261
  %v358 = vmul.f32 %v266, %v266
  %v359 = vmul.f32 %v269, %v269
  %v360 = vmul.f32 %v274, %v274
  %v361 = vmul.f32 %v277, %v277
  %v362 = vmul.f32 %v282, %v282
  %v363 = vmul.f32 %v285, %v285
  %v364 = vmul.f32 %v290, %v290
  %v365 = vmul.f32 %v293, %v293
  %v366 = vsel %vm296, %v350, 0.0
  %v367 = vsel %vm296, %v351, 0.0
  %v368 = vadd.f32 %v366, %v367
  %v369 = vsel %vm296, %v352, 0.0
  %v370 = vadd.f32 %v368, %v369
  %v371 = vsel %vm296, %v353, 0.0
  %v372 = vadd.f32 %v370, %v371
  %v373 = vsel %vm296, %v354, 0.0
  %v374 = vadd.f32 %v372, %v373
  %v375 = vsel %vm296, %v355, 0.0
  %v376 = vadd.f32 %v374, %v375
  %v377 = vsel %vm296, %v356, 0.0
  %v378 = vadd.f32 %v376, %v377
  %v379 = vsel %vm296, %v357, 0.0
  %v380 = vadd.f32 %v378, %v379
  %v381 = vsel %vm296, %v358, 0.0
  %v382 = vadd.f32 %v380, %v381
  %v383 = vsel %vm296, %v359, 0.0
  %v384 = vadd.f32 %v382, %v383
  %v385 = vsel %vm296, %v360, 0.0
  %v386 = vadd.f32 %v384, %v385
  %v387 = vsel %vm296, %v361, 0.0
  %v388 = vadd.f32 %v386, %v387
  %v389 = vsel %vm296, %v362, 0.0
  %v390 = vadd.f32 %v388, %v389
  %v391 = vsel %vm296, %v363, 0.0
  %v392 = vadd.f32 %v390, %v391
  %v393 = vsel %vm296, %v364, 0.0
  %v394 = vadd.f32 %v392, %v393
  %v395 = vsel %vm296, %v365, 0.0
  %v396 = vadd.f32 %v394, %v395
  %v397 = vrot.slane %v396, 4
  %v398 = vadd.f32 %v396, %v397
  %v399 = vrot.slane %v398, 2
  %v400 = vadd.f32 %v398, %v399
  %v401 = vrot.slane %v400, 1
  %v402 = vadd.f32 %v400, %v401
  %v403 = vlaneseq
  %v404 = vshrl.u32 %v403, 7
  %vm405 = vcmp.eq.s32.totalorder %v404, 0
  %vm406 = vcmp.eq.s32.totalorder %v404, 1
  %v407 = vsel %vm406, %v402, 0.0
  %v408 = vsel %vm405, %v349, %v407
  %409 = vst.msk [vmem:[%s3] sm:$0xff] %vm296, %v408
  // Predicated region
  $region10: #{res_trans_block.5} parent=0 // pred_check
    _
  $region11: #{res_trans_block.5} parent=0 // pred_check_branch
    %411 = sbr.rel (0) target = $region13
  $region12: #{res_trans_block.5} parent=0 // pred_region
    _
  $region13: #{res_trans_block.5} parent=0 // pred_fallthru
    _
  // Predicated region
  $region14: #{res_trans_block.5} parent=0 // pred_check
    _
  $region15: #{res_trans_block.5} parent=0 // pred_check_branch
    %413 = sbr.rel (0) target = $region17
  $region16: #{res_trans_block.5} parent=0 // pred_region
    _
  $region17: #{res_trans_block.5} parent=0 // pred_fallthru
    _
  // Predicated region
  $region18: #{res_trans_block.5} parent=0 // pred_check
    _
  $region19: #{res_trans_block.5} parent=0 // pred_check_branch
    %415 = sbr.rel (0) target = $region21
  $region20: #{res_trans_block.5} parent=0 // pred_region
    _
  $region21: #{res_trans_block.5} parent=0 // pred_fallthru
    _
  // Predicated region
  $region22: #{res_trans_block.5} parent=0 // pred_check
    _
  $region23: #{res_trans_block.5} parent=0 // pred_check_branch
    %417 = sbr.rel (0) target = $region25
  $region24: #{res_trans_block.5} parent=0 // pred_region
    _
  $region25: #{res_trans_block.5} parent=0 // pred_fallthru
    _

// kernel: res_trans_block.6
$region0: #{res_trans_block.6}
  #allocation0 [shape = 'u32[]', space=smem, size = 0x4, offset = 0x4, fixed_abs, tag = 'smem constant byte address 0x4 - core index']
  #allocation1 [shape = 'u32[144,128]{1,0:T(1,128)}', space=vmem, size = 0x12000, scoped, tag = 'internal scratch']
  %s0 = inlined_call_operand.vmem [shape: f32[128,32], index: 0, kind: input, shape index: {}]
  %s1 = inlined_call_operand.vmem [shape: f32[1,32], index: 1, kind: input, shape index: {}]
  %s2 = inlined_call_operand.vmem [shape: f32[1,32], index: 2, kind: input, shape index: {}]
  %s3 = inlined_call_operand.vmem [shape: f32[128,32], index: 3, kind: output, shape index: {}]
  %s4 = sld [smem:[#allocation0]]
  $region22: #{res_trans_block.6} parent=0
    _
  %s6 = ssub.s32 1, %s4
  %s7 = scalar_select 0, %s6, %s4
  // Predicated region
  $region2: #{res_trans_block.6} parent=0 // pred_check
    _
  $region3: #{res_trans_block.6} parent=0 // pred_check_branch
    %9 = sbr.rel (0) target = $region5
  $region4: #{res_trans_block.6} parent=0 // pred_region
    _
  $region5: #{res_trans_block.6} parent=0 // pred_fallthru
    _
  // Predicated region
  $region6: #{res_trans_block.6} parent=0 // pred_check
    _
  $region7: #{res_trans_block.6} parent=0 // pred_check_branch
    %11 = sbr.rel (0) target = $region9
  $region8: #{res_trans_block.6} parent=0 // pred_region
    _
  $region9: #{res_trans_block.6} parent=0 // pred_fallthru
    _
  // Predicated region
  $region10: #{res_trans_block.6} parent=0 // pred_check
    _
  $region11: #{res_trans_block.6} parent=0 // pred_check_branch
    %13 = sbr.rel (0) target = $region13
  $region12: #{res_trans_block.6} parent=0 // pred_region
    _
  $region13: #{res_trans_block.6} parent=0 // pred_fallthru
    _
  %v14 = vld [vmem:[%s0] sm:$0xff]
  %v15 = vld [vmem:[%s0 + $0x8] sm:$0xff]
  %v16 = vld [vmem:[%s0 + $0x10] sm:$0xff]
  %v17 = vld [vmem:[%s0 + $0x18] sm:$0xff]
  %v18 = vld [vmem:[%s0 + $0x20] sm:$0xff]
  %v19 = vld [vmem:[%s0 + $0x28] sm:$0xff]
  %v20 = vld [vmem:[%s0 + $0x30] sm:$0xff]
  %v21 = vld [vmem:[%s0 + $0x38] sm:$0xff]
  %v22 = vld [vmem:[%s0 + $0x40] sm:$0xff]
  %v23 = vld [vmem:[%s0 + $0x48] sm:$0xff]
  %v24 = vld [vmem:[%s0 + $0x50] sm:$0xff]
  %v25 = vld [vmem:[%s0 + $0x58] sm:$0xff]
  %v26 = vld [vmem:[%s0 + $0x60] sm:$0xff]
  %v27 = vld [vmem:[%s0 + $0x68] sm:$0xff]
  %v28 = vld [vmem:[%s0 + $0x70] sm:$0xff]
  %v29 = vld [vmem:[%s0 + $0x78] sm:$0xff]
  %v30 = vld [vmem:[%s1] sm:$0x1]
  %v32 = vlaneseq
  %v33 = vshrl.u32 %v32, 7
  %v34 = vsub.s32 0, %v33
  %v35 = vrot.slane %v30, %v34
  %v37 = vmul.f32 %v14, %v35
  %v38 = vmul.f32 %v15, %v35
  %v39 = vmul.f32 %v16, %v35
  %v40 = vmul.f32 %v17, %v35
  %v41 = vmul.f32 %v18, %v35
  %v42 = vmul.f32 %v19, %v35
  %v43 = vmul.f32 %v20, %v35
  %v44 = vmul.f32 %v21, %v35
  %v45 = vmul.f32 %v22, %v35
  %v46 = vmul.f32 %v23, %v35
  %v47 = vmul.f32 %v24, %v35
  %v48 = vmul.f32 %v25, %v35
  %v49 = vmul.f32 %v26, %v35
  %v50 = vmul.f32 %v27, %v35
  %v51 = vmul.f32 %v28, %v35
  %v52 = vmul.f32 %v29, %v35
  %v53 = vld [vmem:[%s2] sm:$0x1]
  %v55 = vlaneseq
  %v56 = vshrl.u32 %v55, 7
  %v57 = vsub.s32 0, %v56
  %v58 = vrot.slane %v53, %v57
  %v60 = vadd.f32 %v37, %v58
  %v61 = vadd.f32 %v38, %v58
  %v62 = vadd.f32 %v39, %v58
  %v63 = vadd.f32 %v40, %v58
  %v64 = vadd.f32 %v41, %v58
  %v65 = vadd.f32 %v42, %v58
  %v66 = vadd.f32 %v43, %v58
  %v67 = vadd.f32 %v44, %v58
  %v68 = vadd.f32 %v45, %v58
  %v69 = vadd.f32 %v46, %v58
  %v70 = vadd.f32 %v47, %v58
  %v71 = vadd.f32 %v48, %v58
  %v72 = vadd.f32 %v49, %v58
  %v73 = vadd.f32 %v50, %v58
  %v74 = vadd.f32 %v51, %v58
  %v75 = vadd.f32 %v52, %v58
  %vm76 = vcmp.ge.f32.partialorder %v60, 0.0
  %vm77 = vcmp.ge.f32.partialorder %v61, 0.0
  %vm78 = vcmp.ge.f32.partialorder %v62, 0.0
  %vm79 = vcmp.ge.f32.partialorder %v63, 0.0
  %vm80 = vcmp.ge.f32.partialorder %v64, 0.0
  %vm81 = vcmp.ge.f32.partialorder %v65, 0.0
  %vm82 = vcmp.ge.f32.partialorder %v66, 0.0
  %vm83 = vcmp.ge.f32.partialorder %v67, 0.0
  %vm84 = vcmp.ge.f32.partialorder %v68, 0.0
  %vm85 = vcmp.ge.f32.partialorder %v69, 0.0
  %vm86 = vcmp.ge.f32.partialorder %v70, 0.0
  %vm87 = vcmp.ge.f32.partialorder %v71, 0.0
  %vm88 = vcmp.ge.f32.partialorder %v72, 0.0
  %vm89 = vcmp.ge.f32.partialorder %v73, 0.0
  %vm90 = vcmp.ge.f32.partialorder %v74, 0.0
  %vm91 = vcmp.ge.f32.partialorder %v75, 0.0
  %v92 = vmul.f32 %v60, 0.2
  %v93 = vmul.f32 %v61, 0.2
  %v94 = vmul.f32 %v62, 0.2
  %v95 = vmul.f32 %v63, 0.2
  %v96 = vmul.f32 %v64, 0.2
  %v97 = vmul.f32 %v65, 0.2
  %v98 = vmul.f32 %v66, 0.2
  %v99 = vmul.f32 %v67, 0.2
  %v100 = vmul.f32 %v68, 0.2
  %v101 = vmul.f32 %v69, 0.2
  %v102 = vmul.f32 %v70, 0.2
  %v103 = vmul.f32 %v71, 0.2
  %v104 = vmul.f32 %v72, 0.2
  %v105 = vmul.f32 %v73, 0.2
  %v106 = vmul.f32 %v74, 0.2
  %v107 = vmul.f32 %v75, 0.2
  %v108 = vsel %vm76, %v60, %v92
  %v109 = vsel %vm77, %v61, %v93
  %v110 = vsel %vm78, %v62, %v94
  %v111 = vsel %vm79, %v63, %v95
  %v112 = vsel %vm80, %v64, %v96
  %v113 = vsel %vm81, %v65, %v97
  %v114 = vsel %vm82, %v66, %v98
  %v115 = vsel %vm83, %v67, %v99
  %v116 = vsel %vm84, %v68, %v100
  %v117 = vsel %vm85, %v69, %v101
  %v118 = vsel %vm86, %v70, %v102
  %v119 = vsel %vm87, %v71, %v103
  %v120 = vsel %vm88, %v72, %v104
  %v121 = vsel %vm89, %v73, %v105
  %v122 = vsel %vm90, %v74, %v106
  %v123 = vsel %vm91, %v75, %v107
  %vm124 = vcmask 261120
  %125 = vst.msk [vmem:[%s3] sm:$0xff] %vm124, %v108
  %126 = vst.msk [vmem:[%s3 + $0x8] sm:$0xff] %vm124, %v109
  %127 = vst.msk [vmem:[%s3 + $0x10] sm:$0xff] %vm124, %v110
  %128 = vst.msk [vmem:[%s3 + $0x18] sm:$0xff] %vm124, %v111
  %129 = vst.msk [vmem:[%s3 + $0x20] sm:$0xff] %vm124, %v112
  %130 = vst.msk [vmem:[%s3 + $0x28] sm:$0xff] %vm124, %v113
  %131 = vst.msk [vmem:[%s3 + $0x30] sm:$0xff] %vm124, %v114
  %132 = vst.msk [vmem:[%s3 + $0x38] sm:$0xff] %vm124, %v115
  %133 = vst.msk [vmem:[%s3 + $0x40] sm:$0xff] %vm124, %v116
  %134 = vst.msk [vmem:[%s3 + $0x48] sm:$0xff] %vm124, %v117
  %135 = vst.msk [vmem:[%s3 + $0x50] sm:$0xff] %vm124, %v118
  %136 = vst.msk [vmem:[%s3 + $0x58] sm:$0xff] %vm124, %v119
  %137 = vst.msk [vmem:[%s3 + $0x60] sm:$0xff] %vm124, %v120
  %138 = vst.msk [vmem:[%s3 + $0x68] sm:$0xff] %vm124, %v121
  %139 = vst.msk [vmem:[%s3 + $0x70] sm:$0xff] %vm124, %v122
  %140 = vst.msk [vmem:[%s3 + $0x78] sm:$0xff] %vm124, %v123
  // Predicated region
  $region14: #{res_trans_block.6} parent=0 // pred_check
    _
  $region15: #{res_trans_block.6} parent=0 // pred_check_branch
    %142 = sbr.rel (0) target = $region17
  $region16: #{res_trans_block.6} parent=0 // pred_region
    _
  $region17: #{res_trans_block.6} parent=0 // pred_fallthru
    _
  // Predicated region
  $region18: #{res_trans_block.6} parent=0 // pred_check
    _
  $region19: #{res_trans_block.6} parent=0 // pred_check_branch
    %144 = sbr.rel (0) target = $region21
  $region20: #{res_trans_block.6} parent=0 // pred_region
    _
  $region21: #{res_trans_block.6} parent=0 // pred_fallthru
    _

// kernel: tile.43
$region0: #{tile.43}
  #allocation0 [shape = 's32[1]{0}', space=sflag, size = 0x4, scoped, tag = 'scoped memory for tile.43']
  %s0 = inlined_call_operand.vmem [shape: f32[4], index: 0, kind: input, shape index: {}]
  %s1 = inlined_call_operand.vmem [shape: f32[16,4], index: 1, kind: output, shape index: {}]
  // Predicated region
  $region2: #{tile.43} parent=0 // pred_check
    _
  $region3: #{tile.43} parent=0 // pred_check_branch
    %3 = sbr.rel (0) target = $region5
  $region4: #{tile.43} parent=0 // pred_region
    _
  $region5: #{tile.43} parent=0 // pred_fallthru
    _
  %v4 = vld [vmem:[%s0] ss:$0 sm:$0xff]
  %5 = vst [vmem:[%s1] sm:$0xff] %v4
  %s6 = scalar_lea.vmem %s1, 8
  %7 = vst [vmem:[%s6] sm:$0xff] %v4

// kernel: tile.56
$region0: #{tile.56}
  %s0 = inlined_call_operand.vmem [shape: f32[16,4], index: 0, kind: input, shape index: {}]
  %s1 = inlined_call_operand.vmem [shape: f32[1,64], index: 1, kind: output, shape index: {}]
  $region1: #{tile.56} parent=0
    #allocation0 [shape = 'u8[4096]{0}', space=vmem, size = 0x1000, scoped, tag = 'scoped mem for output reshape']
    %v2 = vld [vmem:[%s0] sm:$0x1]
    %vm3 = vcmask 31744
    %4 = vst.msk [vmem:[#allocation0] sm:$0x1] %vm3, %v2
    %s5 = scalar_lea.vmem %s0, 15
    %v6 = vld [vmem:[%s5] sm:$0x1]
    %7 = vrot.lane.b32.xlu0 %v6, 60
    %v8 = vpop.permute.xlu0 %7
    %vm9 = vcmask 523744
    %10 = vst.msk [vmem:[#allocation0] sm:$0x1] %vm9, %v8
    %s11 = scalar_lea.vmem %s0, 14
    %v12 = vld [vmem:[%s11] sm:$0x1]
    %13 = vrot.lane.b32.xlu0 %v12, 56
    %v14 = vpop.permute.xlu0 %13
    %vm15 = vcmask 490944
    %16 = vst.msk [vmem:[#allocation0] sm:$0x1] %vm15, %v14
    %s17 = scalar_lea.vmem %s0, 13
    %v18 = vld [vmem:[%s17] sm:$0x1]
    %19 = vrot.lane.b32.xlu0 %v18, 52
    %v20 = vpop.permute.xlu0 %19
    %vm21 = vcmask 458144
    %22 = vst.msk [vmem:[#allocation0] sm:$0x1] %vm21, %v20
    %s23 = scalar_lea.vmem %s0, 12
    %v24 = vld [vmem:[%s23] sm:$0x1]
    %25 = vrot.lane.b32.xlu0 %v24, 48
    %v26 = vpop.permute.xlu0 %25
    %vm27 = vcmask 425344
    %28 = vst.msk [vmem:[#allocation0] sm:$0x1] %vm27, %v26
    %s29 = scalar_lea.vmem %s0, 11
    %v30 = vld [vmem:[%s29] sm:$0x1]
    %31 = vrot.lane.b32.xlu0 %v30, 44
    %v32 = vpop.permute.xlu0 %31
    %vm33 = vcmask 392544
    %34 = vst.msk [vmem:[#allocation0] sm:$0x1] %vm33, %v32
    %s35 = scalar_lea.vmem %s0, 10
    %v36 = vld [vmem:[%s35] sm:$0x1]
    %37 = vrot.lane.b32.xlu0 %v36, 40
    %v38 = vpop.permute.xlu0 %37
    %vm39 = vcmask 359744
    %40 = vst.msk [vmem:[#allocation0] sm:$0x1] %vm39, %v38
    %s41 = scalar_lea.vmem %s0, 9
    %v42 = vld [vmem:[%s41] sm:$0x1]
    %43 = vrot.lane.b32.xlu0 %v42, 36
    %v44 = vpop.permute.xlu0 %43
    %vm45 = vcmask 326944
    %46 = vst.msk [vmem:[#allocation0] sm:$0x1] %vm45, %v44
    %s47 = scalar_lea.vmem %s0, 8
    %v48 = vld [vmem:[%s47] sm:$0x1]
    %49 = vrot.lane.b32.xlu0 %v48, 32
    %v50 = vpop.permute.xlu0 %49
    %vm51 = vcmask 294144
    %52 = vst.msk [vmem:[#allocation0] sm:$0x1] %vm51, %v50
    %s53 = scalar_lea.vmem %s0, 7
    %v54 = vld [vmem:[%s53] sm:$0x1]
    %55 = vrot.lane.b32.xlu0 %v54, 28
    %v56 = vpop.permute.xlu0 %55
    %vm57 = vcmask 261344
    %58 = vst.msk [vmem:[#allocation0] sm:$0x1] %vm57, %v56
    %s59 = scalar_lea.vmem %s0, 6
    %v60 = vld [vmem:[%s59] sm:$0x1]
    %61 = vrot.lane.b32.xlu0 %v60, 24
    %v62 = vpop.permute.xlu0 %61
    %vm63 = vcmask 228544
    %64 = vst.msk [vmem:[#allocation0] sm:$0x1] %vm63, %v62
    %s65 = scalar_lea.vmem %s0, 5
    %v66 = vld [vmem:[%s65] sm:$0x1]
    %67 = vrot.lane.b32.xlu0 %v66, 20
    %v68 = vpop.permute.xlu0 %67
    %vm69 = vcmask 195744
    %70 = vst.msk [vmem:[#allocation0] sm:$0x1] %vm69, %v68
    %s71 = scalar_lea.vmem %s0, 4
    %v72 = vld [vmem:[%s71] sm:$0x1]
    %73 = vrot.lane.b32.xlu0 %v72, 16
    %v74 = vpop.permute.xlu0 %73
    %vm75 = vcmask 162944
    %76 = vst.msk [vmem:[#allocation0] sm:$0x1] %vm75, %v74
    %s77 = scalar_lea.vmem %s0, 3
    %v78 = vld [vmem:[%s77] sm:$0x1]
    %79 = vrot.lane.b32.xlu0 %v78, 12
    %v80 = vpop.permute.xlu0 %79
    %vm81 = vcmask 130144
    %82 = vst.msk [vmem:[#allocation0] sm:$0x1] %vm81, %v80
    %s83 = scalar_lea.vmem %s0, 2
    %v84 = vld [vmem:[%s83] sm:$0x1]
    %85 = vrot.lane.b32.xlu0 %v84, 8
    %v86 = vpop.permute.xlu0 %85
    %vm87 = vcmask 97344
    %88 = vst.msk [vmem:[#allocation0] sm:$0x1] %vm87, %v86
    %s89 = scalar_lea.vmem %s0, 1
    %v90 = vld [vmem:[%s89] sm:$0x1]
    %91 = vrot.lane.b32.xlu0 %v90, 4
    %v92 = vpop.permute.xlu0 %91
    %vm93 = vcmask 64544
    %94 = vst.msk [vmem:[#allocation0] sm:$0x1] %vm93, %v92
    %s96 = sshllo.u32 0, 1
    %v98 = vld [vmem:[#allocation0] sm:%s96]
    %s99 = sshllo.u32 0, 1
    %100 = vst [vmem:[%s1] sm:%s99] %v98

// kernel: res_trans_block.7
$region0: #{res_trans_block.7}
  #allocation0 [shape = 'u32[]', space=smem, size = 0x4, offset = 0x4, fixed_abs, tag = 'smem constant byte address 0x4 - core index']
  #allocation1 [shape = 'u32[144,128]{1,0:T(1,128)}', space=vmem, size = 0x12000, scoped, tag = 'internal scratch']
  %s0 = inlined_call_operand.vmem [shape: bf16[512,72], index: 0, kind: input, shape index: {}]
  %s1 = inlined_call_operand.vmem [shape: bf16[72,16], index: 1, kind: input, shape index: {}]
  %s2 = inlined_call_operand.vmem [shape: f32[512,16], index: 2, kind: output, shape index: {0}]
  %s3 = inlined_call_operand.vmem [shape: f32[16,16], index: 3, kind: output, shape index: {1}]
  %4 = xla_tuple %s2, %s3
  %s5 = sld [smem:[#allocation0]]
  $region49: #{res_trans_block.7} parent=0
    _
  %s7 = ssub.s32 1, %s5
  %s8 = scalar_select 0, %s7, %s5
  loop: start=0, step=1, limit=4
  $region2: #{res_trans_block.7} parent=0 // loop_pre_header
    _
  $region3: #{res_trans_block.7} parent=0 // loop_header
    %s10 = sphi 0, %s14
    %p11 = scmp.ge.s32.totalorder %s10, 4
    %s20 = sphi 0, %s22
    %s23 = sphi 0, %s20
    %s24 = sphi 0, %s23
    %s40 = sphi 0, %s24
    %s44 = sphi 0, %s44
    %s46 = sphi 0, %s44
    %s47 = sphi 0, %s46
    %s61 = sphi 0, %s47
    %s67 = sphi 0, %s69
    %s70 = sphi 0, %s67
    %s71 = sphi 0, %s70
    %s87 = sphi 0, %s71
    %s93 = sphi 0, %s95
    %s96 = sphi 0, %s93
    %s97 = sphi 0, %s96
    %s113 = sphi 0, %s97
  $region4: #{res_trans_block.7} parent=0 // loop_header_branch
    %13 = sbr.rel (%p11) target = $region8
  $region5: #{res_trans_block.7} parent=0 // loop_body
    %s15 = ssub.s32 %s10, 1
    %s16 = ssub.s32 %s10, 2
    %s17 = sadd.s32 %s10, 1
    %s18 = ssub.s32 %s10, %s17
    %p19 = scmp.eq.s32.totalorder %s18, 0
    %s21 = sadd.s32 %s20, 1
    %s22 = scalar_select %p19, %s20, %s21
    %p25 = pneg %p19
    %p26 = scmp.eq.s32.totalorder %s10, 1
    %p27 = por %p25, %p26
    %p28 = scmp.ne.s32.totalorder %s20, %s23
    %p29 = scmp.eq.s32.totalorder %s10, 0
    %p30 = por %p28, %p29
    %p31 = scmp.ne.s32.totalorder %s20, %s23
    %p32 = scmp.eq.s32.totalorder %s15, 1
    %p33 = por %p31, %p32
    %p34 = scmp.ne.s32.totalorder %s23, %s24
    %p35 = scmp.eq.s32.totalorder %s15, 0
    %p36 = por %p34, %p35
    %p37 = scmp.ne.s32.totalorder %s23, %s24
    %p38 = scmp.eq.s32.totalorder %s16, 1
    %p39 = por %p37, %p38
    %p41 = scmp.ne.s32.totalorder %s24, %s40
    %p42 = scmp.eq.s32.totalorder %s16, 0
    %p43 = por %p41, %p42
    %s45 = sadd.s32 %s44, 1
    %p48 = scmp.eq.s32.totalorder %s10, 1
    %p49 = scmp.ne.s32.totalorder %s44, %s46
    %p50 = scmp.eq.s32.totalorder %s10, 0
    %p51 = por %p49, %p50
    %p52 = scmp.ne.s32.totalorder %s44, %s46
    %p53 = scmp.eq.s32.totalorder %s15, 1
    %p54 = por %p52, %p53
    %p55 = scmp.ne.s32.totalorder %s46, %s47
    %p56 = scmp.eq.s32.totalorder %s15, 0
    %p57 = por %p55, %p56
    %p58 = scmp.ne.s32.totalorder %s46, %s47
    %p59 = scmp.eq.s32.totalorder %s16, 1
    %p60 = por %p58, %p59
    %p62 = scmp.ne.s32.totalorder %s47, %s61
    %p63 = scmp.eq.s32.totalorder %s16, 0
    %p64 = por %p62, %p63
    %s65 = ssub.s32 %s10, %s17
    %p66 = scmp.eq.s32.totalorder %s65, 0
    %s68 = sadd.s32 %s67, 1
    %s69 = scalar_select %p66, %s67, %s68
    %p72 = pneg %p66
    %p73 = scmp.eq.s32.totalorder %s10, 1
    %p74 = por %p72, %p73
    %p75 = scmp.ne.s32.totalorder %s67, %s70
    %p76 = scmp.eq.s32.totalorder %s10, 0
    %p77 = por %p75, %p76
    %p78 = scmp.ne.s32.totalorder %s67, %s70
    %p79 = scmp.eq.s32.totalorder %s15, 1
    %p80 = por %p78, %p79
    %p81 = scmp.ne.s32.totalorder %s70, %s71
    %p82 = scmp.eq.s32.totalorder %s15, 0
    %p83 = por %p81, %p82
    %p84 = scmp.ne.s32.totalorder %s70, %s71
    %p85 = scmp.eq.s32.totalorder %s16, 1
    %p86 = por %p84, %p85
    %p88 = scmp.ne.s32.totalorder %s71, %s87
    %p89 = scmp.eq.s32.totalorder %s16, 0
    %p90 = por %p88, %p89
    %s91 = ssub.s32 %s10, %s17
    %p92 = scmp.eq.s32.totalorder %s91, 0
    %s94 = sadd.s32 %s93, 1
    %s95 = scalar_select %p92, %s93, %s94
    %p98 = pneg %p92
    %p99 = scmp.eq.s32.totalorder %s10, 1
    %p100 = por %p98, %p99
    %p101 = scmp.ne.s32.totalorder %s93, %s96
    %p102 = scmp.eq.s32.totalorder %s10, 0
    %p103 = por %p101, %p102
    %p104 = scmp.ne.s32.totalorder %s93, %s96
    %p105 = scmp.eq.s32.totalorder %s15, 1
    %p106 = por %p104, %p105
    %p107 = scmp.ne.s32.totalorder %s96, %s97
    %p108 = scmp.eq.s32.totalorder %s15, 0
    %p109 = por %p107, %p108
    %p110 = scmp.ne.s32.totalorder %s96, %s97
    %p111 = scmp.eq.s32.totalorder %s16, 1
    %p112 = por %p110, %p111
    %p114 = scmp.ne.s32.totalorder %s97, %s113
    %p115 = scmp.eq.s32.totalorder %s16, 0
    %p116 = por %p114, %p115
    %p117 = scmp.le.s32.totalorder 1, %s10
    %p118 = scmp.lt.s32.totalorder %s10, 3
    %p119 = pnand %p117, %p118
    %p120 = pneg %p119
    // Predicated region
    $region9: #{res_trans_block.7} parent=5 // pred_check
      _
    $region10: #{res_trans_block.7} parent=5 // pred_check_branch
      %122 = sbr.rel (%p119) target = $region12
    $region11: #{res_trans_block.7} parent=5 // pred_region
      %s123 = ssub.s32 %s10, 1
      // Predicated region
      $region13: #{res_trans_block.7} parent=11 // pred_check
        %p124 = pneg %p57
      $region14: #{res_trans_block.7} parent=11 // pred_check_branch
        %126 = sbr.rel (%p124) target = $region16
      $region15: #{res_trans_block.7} parent=11 // pred_region
        _
      $region16: #{res_trans_block.7} parent=11 // pred_fallthru
        _
    $region12: #{res_trans_block.7} parent=5 // pred_fallthru
      _
    %p127 = scmp.lt.s32.totalorder %s10, 2
    // Predicated region
    $region17: #{res_trans_block.7} parent=5 // pred_check
      %p128 = pneg %p127
    $region18: #{res_trans_block.7} parent=5 // pred_check_branch
      %130 = sbr.rel (%p128) target = $region20
    $region19: #{res_trans_block.7} parent=5 // pred_region
      // Predicated region
      $region21: #{res_trans_block.7} parent=19 // pred_check
        %p131 = pneg %p30
      $region22: #{res_trans_block.7} parent=19 // pred_check_branch
        %133 = sbr.rel (%p131) target = $region24
      $region23: #{res_trans_block.7} parent=19 // pred_region
        %s134 = smul.u32 32, %s10
        %p135 = scmp.lt.s32.totalorder %s134, 63
        %s136 = scalar_select %p135, %s134, 63
        %s137 = smul.addr %s136, 4
        %s138 = scalar_lea.vmem %s0, %s137
        %s139 = smul.u32 32, %s10
      $region24: #{res_trans_block.7} parent=19 // pred_fallthru
        _
    $region20: #{res_trans_block.7} parent=5 // pred_fallthru
      _
    %p140 = scmp.le.s32.totalorder 1, %s10
    %p141 = scmp.lt.s32.totalorder %s10, 3
    %p142 = pnand %p140, %p141
    %p143 = pneg %p142
    // Predicated region
    $region25: #{res_trans_block.7} parent=5 // pred_check
      _
    $region26: #{res_trans_block.7} parent=5 // pred_check_branch
      %145 = sbr.rel (%p142) target = $region28
    $region27: #{res_trans_block.7} parent=5 // pred_region
      %s146 = ssub.s32 %s10, 1
      %s147 = smul.u32 32, %s15
      %p148 = scmp.lt.s32.totalorder %s147, 63
      %s149 = scalar_select %p148, %s147, 63
      %s150 = smul.addr %s149, 4
      %s151 = scalar_lea.vmem %s0, %s150
      %p152 = pneg %p36
      %p153 = pneg %p33
      %p154 = pneg %p57
      %p155 = pneg %p54
      %p156 = pneg %p83
      %p157 = pneg %p80
      %s158 = smul.u32 32, %s15
      %p159 = scmp.lt.s32.totalorder %s158, 63
      %s160 = scalar_select %p159, %s158, 63
      %s161 = smul.addr %s160, 8
      %s162 = scalar_lea.vmem %s2, %s161
      %p163 = pneg %p109
      %p164 = pneg %p106
      %p165 = scmp.lt.s32.totalorder %s15, 1
      %s166 = scalar_select %p165, %s15, 1
      %s167 = smul.addr %s166, 8
      %s168 = scalar_lea.vmem %s3, %s167
      %s169 = smul.u32 32, %s15
      %p170 = scmp.lt.s32.totalorder %s169, 63
      %s171 = scalar_select %p170, %s169, 63
      %s172 = smul.addr %s171, 4
      %s173 = scalar_lea.vmem %s0, %s172
      %s174 = smul.u32 32, %s15
      %s175 = smul.u32 32, %s15
      %p176 = scmp.lt.s32.totalorder %s175, 63
      %s177 = scalar_select %p176, %s175, 63
      %s178 = smul.addr %s177, 8
      %s179 = scalar_lea.vmem %s2, %s178
      %s180 = smul.u32 32, %s15
      %p181 = scmp.lt.s32.totalorder %s15, 1
      %s182 = scalar_select %p181, %s15, 1
      %s183 = smul.addr %s182, 8
      %s184 = scalar_lea.vmem %s3, %s183
      %v186 = vld [vmem:[%s173] sm:$0xf]
      %v187 = vld [vmem:[%s173 + $0x4] sm:$0xf]
      %v188 = vld [vmem:[%s173 + $0x8] sm:$0xf]
      %v189 = vld [vmem:[%s173 + $0xc] sm:$0xf]
      %v190 = vld [vmem:[%s173 + $0x10] sm:$0xf]
      %v191 = vld [vmem:[%s173 + $0x14] sm:$0xf]
      %v192 = vld [vmem:[%s173 + $0x18] sm:$0xf]
      %v193 = vld [vmem:[%s173 + $0x1c] sm:$0xf]
      %v194 = vld [vmem:[%s173 + $0x20] sm:$0xf]
      %v195 = vld [vmem:[%s173 + $0x24] sm:$0xf]
      %v196 = vld [vmem:[%s173 + $0x28] sm:$0xf]
      %v197 = vld [vmem:[%s173 + $0x2c] sm:$0xf]
      %v198 = vld [vmem:[%s173 + $0x30] sm:$0xf]
      %v199 = vld [vmem:[%s173 + $0x34] sm:$0xf]
      %v200 = vld [vmem:[%s173 + $0x38] sm:$0xf]
      %v201 = vld [vmem:[%s173 + $0x3c] sm:$0xf]
      %v202 = vld [vmem:[%s173 + $0x40] sm:$0xf]
      %v203 = vld [vmem:[%s173 + $0x44] sm:$0xf]
      %v204 = vld [vmem:[%s173 + $0x48] sm:$0xf]
      %v205 = vld [vmem:[%s173 + $0x4c] sm:$0xf]
      %v206 = vld [vmem:[%s173 + $0x50] sm:$0xf]
      %v207 = vld [vmem:[%s173 + $0x54] sm:$0xf]
      %v208 = vld [vmem:[%s173 + $0x58] sm:$0xf]
      %v209 = vld [vmem:[%s173 + $0x5c] sm:$0xf]
      %v210 = vld [vmem:[%s173 + $0x60] sm:$0xf]
      %v211 = vld [vmem:[%s173 + $0x64] sm:$0xf]
      %v212 = vld [vmem:[%s173 + $0x68] sm:$0xf]
      %v213 = vld [vmem:[%s173 + $0x6c] sm:$0xf]
      %v214 = vld [vmem:[%s173 + $0x70] sm:$0xf]
      %v215 = vld [vmem:[%s173 + $0x74] sm:$0xf]
      %v216 = vld [vmem:[%s173 + $0x78] sm:$0xf]
      %v217 = vld [vmem:[%s173 + $0x7c] sm:$0xf]
      %v218 = vld [vmem:[%s1] sm:$0xf]
      %v219 = vld [vmem:[%s1 + $0x4] sm:$0xf]
      %v220 = vld [vmem:[%s1 + $0x8] sm:$0xf]
      %v221 = vld [vmem:[%s1 + $0xc] sm:$0xf]
      %v222 = vld [vmem:[%s1 + $0x10] sm:$0xf]
      %v223 = vld [vmem:[%s1 + $0x14] sm:$0xf]
      %v224 = vld [vmem:[%s1 + $0x18] sm:$0xf]
      %v225 = vld [vmem:[%s1 + $0x1c] sm:$0xf]
      %v226 = vld [vmem:[%s1 + $0x20] sm:$0xf]
      %v259 = vunpack.c.l.b16 %v186
      %v260 = vunpack.c.l.b16 %v187
      %v261 = vunpack.c.l.b16 %v188
      %v262 = vunpack.c.l.b16 %v189
      %v263 = vunpack.c.l.b16 %v190
      %v264 = vunpack.c.l.b16 %v191
      %v265 = vunpack.c.l.b16 %v192
      %v266 = vunpack.c.l.b16 %v193
      %v267 = vunpack.c.l.b16 %v194
      %v268 = vunpack.c.l.b16 %v195
      %v269 = vunpack.c.l.b16 %v196
      %v270 = vunpack.c.l.b16 %v197
      %v271 = vunpack.c.l.b16 %v198
      %v272 = vunpack.c.l.b16 %v199
      %v273 = vunpack.c.l.b16 %v200
      %v274 = vunpack.c.l.b16 %v201
      %v275 = vunpack.c.l.b16 %v202
      %v276 = vunpack.c.l.b16 %v203
      %v277 = vunpack.c.l.b16 %v204
      %v278 = vunpack.c.l.b16 %v205
      %v279 = vunpack.c.l.b16 %v206
      %v280 = vunpack.c.l.b16 %v207
      %v281 = vunpack.c.l.b16 %v208
      %v282 = vunpack.c.l.b16 %v209
      %v283 = vunpack.c.l.b16 %v210
      %v284 = vunpack.c.l.b16 %v211
      %v285 = vunpack.c.l.b16 %v212
      %v286 = vunpack.c.l.b16 %v213
      %v287 = vunpack.c.l.b16 %v214
      %v288 = vunpack.c.l.b16 %v215
      %v289 = vunpack.c.l.b16 %v216
      %v290 = vunpack.c.l.b16 %v217
      %v291 = vpack.c.b16 %v260, %v259
      %v292 = vpack.c.b16 %v262, %v261
      %v293 = vpack.c.b16 %v264, %v263
      %v294 = vpack.c.b16 %v266, %v265
      %v295 = vpack.c.b16 %v268, %v267
      %v296 = vpack.c.b16 %v270, %v269
      %v297 = vpack.c.b16 %v272, %v271
      %v298 = vpack.c.b16 %v274, %v273
      %v299 = vpack.c.b16 %v276, %v275
      %v300 = vpack.c.b16 %v278, %v277
      %v301 = vpack.c.b16 %v280, %v279
      %v302 = vpack.c.b16 %v282, %v281
      %v303 = vpack.c.b16 %v284, %v283
      %v304 = vpack.c.b16 %v286, %v285
      %v305 = vpack.c.b16 %v288, %v287
      %v306 = vpack.c.b16 %v290, %v289
      %v316 = vunpack.c.l.b16 %v218
      %v317 = vunpack.c.l.b16 %v219
      %v318 = vunpack.c.l.b16 %v220
      %v319 = vunpack.c.l.b16 %v221
      %v320 = vunpack.c.l.b16 %v222
      %v321 = vunpack.c.l.b16 %v223
      %v322 = vunpack.c.l.b16 %v224
      %v323 = vunpack.c.l.b16 %v225
      %v324 = vunpack.c.l.b16 %v226
      %v325 = vpack.c.b16 %v317, %v316
      %v326 = vpack.c.b16 %v319, %v318
      %v327 = vpack.c.b16 %v321, %v320
      %v328 = vpack.c.b16 %v323, %v322
      %v329 = vpack.c.b16 %v324, %v324
      %vm334 = vcmask 588800
      %v336 = vsel %vm334, %v291, 0
      %v339 = vsel %vm334, %v292, 0
      %v342 = vsel %vm334, %v293, 0
      %v345 = vsel %vm334, %v294, 0
      %v348 = vsel %vm334, %v295, 0
      %v351 = vsel %vm334, %v296, 0
      %v354 = vsel %vm334, %v297, 0
      %v357 = vsel %vm334, %v298, 0
      %v360 = vsel %vm334, %v299, 0
      %v363 = vsel %vm334, %v300, 0
      %v366 = vsel %vm334, %v301, 0
      %v369 = vsel %vm334, %v302, 0
      %v372 = vsel %vm334, %v303, 0
      %v375 = vsel %vm334, %v304, 0
      %v378 = vsel %vm334, %v305, 0
      %v381 = vsel %vm334, %v306, 0
      %vm383 = vcmask 1043456
      %v385 = vsel %vm383, %v329, 0
      %387 = vmatprep.subr.bf16.mxu0 0
      %388 = vmatpush1.bf16.msra.mxu0 %v325
      %389 = vmatprep.subr.bf16.mxu0 0
      %390 = vmatpush1.bf16.msra.mxu0 %v326
      %391 = vmatprep.subr.bf16.mxu0 0
      %392 = vmatpush1.bf16.msra.mxu0 %v327
      %393 = vmatprep.subr.bf16.mxu0 0
      %394 = vmatpush1.bf16.msra.mxu0 %v328
      %395 = vmatprep.subr.bf16.mxu0 0
      %396 = vmatpush1.bf16.msra.mxu0 %v385
      %397 = vmatprep.subr.bf16.mxu0 0
      %398 = vmatpush1.bf16.msra.mxu0 0
      %399 = vmatprep.subr.bf16.mxu0 0
      %400 = vmatpush1.bf16.msra.mxu0 0
      %401 = vmatprep.subr.bf16.mxu0 0
      %402 = vmatpush1.bf16.msra.mxu0 0
      %403 = vmatprep.subr.bf16.mxu0 0
      %404 = vmatpush1.bf16.msra.mxu0 0
      %405 = vmatprep.subr.bf16.mxu0 0
      %406 = vmatpush1.bf16.msra.mxu0 0
      %407 = vmatprep.subr.bf16.mxu0 0
      %408 = vmatpush1.bf16.msra.mxu0 0
      %409 = vmatprep.subr.bf16.mxu0 0
      %410 = vmatpush1.bf16.msra.mxu0 0
      %411 = vmatprep.subr.bf16.mxu0 0
      %412 = vmatpush1.bf16.msra.mxu0 0
      %413 = vmatprep.subr.bf16.mxu0 0
      %414 = vmatpush1.bf16.msra.mxu0 0
      %415 = vmatprep.subr.bf16.mxu0 0
      %416 = vmatpush1.bf16.msra.mxu0 0
      %417 = vmatprep.subr.bf16.mxu0 0
      %418 = vmatpush1.bf16.msra.mxu0 0
      %419 = vmatprep.mubr.bf16.mxu0 0
      %420 = vmatmul.mubr.bf16.gmra.mrb[0].mxu0 %v336
      %v421 = vpop.f32.mrb[0].mxu0
      %v422 = vadd.f32 0.0, %v421
      %v423 = vpop.f32.mrb[0].mxu0
      %v424 = vpop.f32.mrb[0].mxu0
      %v425 = vadd.f32 0.0, %v424
      %v426 = vpop.f32.mrb[0].mxu0
      %427 = vmatprep.mubr.bf16.mxu0 0
      %428 = vmatmul.mubr.bf16.gmra.mrb[0].mxu0 %v339
      %v429 = vpop.f32.mrb[0].mxu0
      %v430 = vadd.f32 0.0, %v429
      %v431 = vpop.f32.mrb[0].mxu0
      %v432 = vpop.f32.mrb[0].mxu0
      %v433 = vadd.f32 0.0, %v432
      %v434 = vpop.f32.mrb[0].mxu0
      %435 = vmatprep.mubr.bf16.mxu0 0
      %436 = vmatmul.mubr.bf16.gmra.mrb[0].mxu0 %v342
      %v437 = vpop.f32.mrb[0].mxu0
      %v438 = vadd.f32 0.0, %v437
      %v439 = vpop.f32.mrb[0].mxu0
      %v440 = vpop.f32.mrb[0].mxu0
      %v441 = vadd.f32 0.0, %v440
      %v442 = vpop.f32.mrb[0].mxu0
      %443 = vmatprep.mubr.bf16.mxu0 0
      %444 = vmatmul.mubr.bf16.gmra.mrb[0].mxu0 %v345
      %v445 = vpop.f32.mrb[0].mxu0
      %v446 = vadd.f32 0.0, %v445
      %v447 = vpop.f32.mrb[0].mxu0
      %v448 = vpop.f32.mrb[0].mxu0
      %v449 = vadd.f32 0.0, %v448
      %v450 = vpop.f32.mrb[0].mxu0
      %451 = vmatprep.mubr.bf16.mxu0 0
      %452 = vmatmul.mubr.bf16.gmra.mrb[0].mxu0 %v348
      %v453 = vpop.f32.mrb[0].mxu0
      %v454 = vadd.f32 0.0, %v453
      %v455 = vpop.f32.mrb[0].mxu0
      %v456 = vpop.f32.mrb[0].mxu0
      %v457 = vadd.f32 0.0, %v456
      %v458 = vpop.f32.mrb[0].mxu0
      %459 = vmatprep.mubr.bf16.mxu0 0
      %460 = vmatmul.mubr.bf16.gmra.mrb[0].mxu0 %v351
      %v461 = vpop.f32.mrb[0].mxu0
      %v462 = vadd.f32 0.0, %v461
      %v463 = vpop.f32.mrb[0].mxu0
      %v464 = vpop.f32.mrb[0].mxu0
      %v465 = vadd.f32 0.0, %v464
      %v466 = vpop.f32.mrb[0].mxu0
      %467 = vmatprep.mubr.bf16.mxu0 0
      %468 = vmatmul.mubr.bf16.gmra.mrb[0].mxu0 %v354
      %v469 = vpop.f32.mrb[0].mxu0
      %v470 = vadd.f32 0.0, %v469
      %v471 = vpop.f32.mrb[0].mxu0
      %v472 = vpop.f32.mrb[0].mxu0
      %v473 = vadd.f32 0.0, %v472
      %v474 = vpop.f32.mrb[0].mxu0
      %475 = vmatprep.mubr.bf16.mxu0 0
      %476 = vmatmul.mubr.bf16.gmra.mrb[0].mxu0 %v357
      %v477 = vpop.f32.mrb[0].mxu0
      %v478 = vadd.f32 0.0, %v477
      %v479 = vpop.f32.mrb[0].mxu0
      %v480 = vpop.f32.mrb[0].mxu0
      %v481 = vadd.f32 0.0, %v480
      %v482 = vpop.f32.mrb[0].mxu0
      %483 = vmatprep.mubr.bf16.mxu0 0
      %484 = vmatmul.mubr.bf16.gmra.mrb[0].mxu0 %v360
      %v485 = vpop.f32.mrb[0].mxu0
      %v486 = vadd.f32 0.0, %v485
      %v487 = vpop.f32.mrb[0].mxu0
      %v488 = vpop.f32.mrb[0].mxu0
      %v489 = vadd.f32 0.0, %v488
      %v490 = vpop.f32.mrb[0].mxu0
      %491 = vmatprep.mubr.bf16.mxu0 0
      %492 = vmatmul.mubr.bf16.gmra.mrb[0].mxu0 %v363
      %v493 = vpop.f32.mrb[0].mxu0
      %v494 = vadd.f32 0.0, %v493
      %v495 = vpop.f32.mrb[0].mxu0
      %v496 = vpop.f32.mrb[0].mxu0
      %v497 = vadd.f32 0.0, %v496
      %v498 = vpop.f32.mrb[0].mxu0
      %499 = vmatprep.mubr.bf16.mxu0 0
      %500 = vmatmul.mubr.bf16.gmra.mrb[0].mxu0 %v366
      %v501 = vpop.f32.mrb[0].mxu0
      %v502 = vadd.f32 0.0, %v501
      %v503 = vpop.f32.mrb[0].mxu0
      %v504 = vpop.f32.mrb[0].mxu0
      %v505 = vadd.f32 0.0, %v504
      %v506 = vpop.f32.mrb[0].mxu0
      %507 = vmatprep.mubr.bf16.mxu0 0
      %508 = vmatmul.mubr.bf16.gmra.mrb[0].mxu0 %v369
      %v509 = vpop.f32.mrb[0].mxu0
      %v510 = vadd.f32 0.0, %v509
      %v511 = vpop.f32.mrb[0].mxu0
      %v512 = vpop.f32.mrb[0].mxu0
      %v513 = vadd.f32 0.0, %v512
      %v514 = vpop.f32.mrb[0].mxu0
      %515 = vmatprep.mubr.bf16.mxu0 0
      %516 = vmatmul.mubr.bf16.gmra.mrb[0].mxu0 %v372
      %v517 = vpop.f32.mrb[0].mxu0
      %v518 = vadd.f32 0.0, %v517
      %v519 = vpop.f32.mrb[0].mxu0
      %v520 = vpop.f32.mrb[0].mxu0
      %v521 = vadd.f32 0.0, %v520
      %v522 = vpop.f32.mrb[0].mxu0
      %523 = vmatprep.mubr.bf16.mxu0 0
      %524 = vmatmul.mubr.bf16.gmra.mrb[0].mxu0 %v375
      %v525 = vpop.f32.mrb[0].mxu0
      %v526 = vadd.f32 0.0, %v525
      %v527 = vpop.f32.mrb[0].mxu0
      %v528 = vpop.f32.mrb[0].mxu0
      %v529 = vadd.f32 0.0, %v528
      %v530 = vpop.f32.mrb[0].mxu0
      %531 = vmatprep.mubr.bf16.mxu0 0
      %532 = vmatmul.mubr.bf16.gmra.mrb[0].mxu0 %v378
      %v533 = vpop.f32.mrb[0].mxu0
      %v534 = vadd.f32 0.0, %v533
      %v535 = vpop.f32.mrb[0].mxu0
      %v536 = vpop.f32.mrb[0].mxu0
      %v537 = vadd.f32 0.0, %v536
      %v538 = vpop.f32.mrb[0].mxu0
      %539 = vmatprep.mubr.bf16.mxu0 0
      %540 = vmatmul.mubr.bf16.gmra.mrb[0].mxu0 %v381
      %v541 = vpop.f32.mrb[0].mxu0
      %v542 = vadd.f32 0.0, %v541
      %v543 = vpop.f32.mrb[0].mxu0
      %v544 = vpop.f32.mrb[0].mxu0
      %v545 = vadd.f32 0.0, %v544
      %v546 = vpop.f32.mrb[0].mxu0
      %547 = vdwg.mxu0
      %vm548 = vcmask 130048
      %549 = vst.msk [vmem:[%s179] sm:$0xff] %vm548, %v422
      %550 = vst.msk [vmem:[%s179 + $0x8] sm:$0xff] %vm548, %v425
      %551 = vst.msk [vmem:[%s179 + $0x10] sm:$0xff] %vm548, %v430
      %552 = vst.msk [vmem:[%s179 + $0x18] sm:$0xff] %vm548, %v433
      %553 = vst.msk [vmem:[%s179 + $0x20] sm:$0xff] %vm548, %v438
      %554 = vst.msk [vmem:[%s179 + $0x28] sm:$0xff] %vm548, %v441
      %555 = vst.msk [vmem:[%s179 + $0x30] sm:$0xff] %vm548, %v446
      %556 = vst.msk [vmem:[%s179 + $0x38] sm:$0xff] %vm548, %v449
      %557 = vst.msk [vmem:[%s179 + $0x40] sm:$0xff] %vm548, %v454
      %558 = vst.msk [vmem:[%s179 + $0x48] sm:$0xff] %vm548, %v457
      %559 = vst.msk [vmem:[%s179 + $0x50] sm:$0xff] %vm548, %v462
      %560 = vst.msk [vmem:[%s179 + $0x58] sm:$0xff] %vm548, %v465
      %561 = vst.msk [vmem:[%s179 + $0x60] sm:$0xff] %vm548, %v470
      %562 = vst.msk [vmem:[%s179 + $0x68] sm:$0xff] %vm548, %v473
      %563 = vst.msk [vmem:[%s179 + $0x70] sm:$0xff] %vm548, %v478
      %564 = vst.msk [vmem:[%s179 + $0x78] sm:$0xff] %vm548, %v481
      %565 = vst.msk [vmem:[%s179 + $0x80] sm:$0xff] %vm548, %v486
      %566 = vst.msk [vmem:[%s179 + $0x88] sm:$0xff] %vm548, %v489
      %567 = vst.msk [vmem:[%s179 + $0x90] sm:$0xff] %vm548, %v494
      %568 = vst.msk [vmem:[%s179 + $0x98] sm:$0xff] %vm548, %v497
      %569 = vst.msk [vmem:[%s179 + $0xa0] sm:$0xff] %vm548, %v502
      %570 = vst.msk [vmem:[%s179 + $0xa8] sm:$0xff] %vm548, %v505
      %571 = vst.msk [vmem:[%s179 + $0xb0] sm:$0xff] %vm548, %v510
      %572 = vst.msk [vmem:[%s179 + $0xb8] sm:$0xff] %vm548, %v513
      %573 = vst.msk [vmem:[%s179 + $0xc0] sm:$0xff] %vm548, %v518
      %574 = vst.msk [vmem:[%s179 + $0xc8] sm:$0xff] %vm548, %v521
      %575 = vst.msk [vmem:[%s179 + $0xd0] sm:$0xff] %vm548, %v526
      %576 = vst.msk [vmem:[%s179 + $0xd8] sm:$0xff] %vm548, %v529
      %577 = vst.msk [vmem:[%s179 + $0xe0] sm:$0xff] %vm548, %v534
      %578 = vst.msk [vmem:[%s179 + $0xe8] sm:$0xff] %vm548, %v537
      %579 = vst.msk [vmem:[%s179 + $0xf0] sm:$0xff] %vm548, %v542
      %580 = vst.msk [vmem:[%s179 + $0xf8] sm:$0xff] %vm548, %v545
      %v581 = vsel %vm548, %v422, 0.0
      %v582 = vsel %vm548, %v425, 0.0
      %v583 = vadd.f32 %v581, %v582
      %v584 = vsel %vm548, %v430, 0.0
      %v585 = vadd.f32 %v583, %v584
      %v586 = vsel %vm548, %v433, 0.0
      %v587 = vadd.f32 %v585, %v586
      %v588 = vsel %vm548, %v438, 0.0
      %v589 = vadd.f32 %v587, %v588
      %v590 = vsel %vm548, %v441, 0.0
      %v591 = vadd.f32 %v589, %v590
      %v592 = vsel %vm548, %v446, 0.0
      %v593 = vadd.f32 %v591, %v592
      %v594 = vsel %vm548, %v449, 0.0
      %v595 = vadd.f32 %v593, %v594
      %v596 = vsel %vm548, %v454, 0.0
      %v597 = vadd.f32 %v595, %v596
      %v598 = vsel %vm548, %v457, 0.0
      %v599 = vadd.f32 %v597, %v598
      %v600 = vsel %vm548, %v462, 0.0
      %v601 = vadd.f32 %v599, %v600
      %v602 = vsel %vm548, %v465, 0.0
      %v603 = vadd.f32 %v601, %v602
      %v604 = vsel %vm548, %v470, 0.0
      %v605 = vadd.f32 %v603, %v604
      %v606 = vsel %vm548, %v473, 0.0
      %v607 = vadd.f32 %v605, %v606
      %v608 = vsel %vm548, %v478, 0.0
      %v609 = vadd.f32 %v607, %v608
      %v610 = vsel %vm548, %v481, 0.0
      %v611 = vadd.f32 %v609, %v610
      %v612 = vsel %vm548, %v486, 0.0
      %v613 = vadd.f32 %v611, %v612
      %v614 = vsel %vm548, %v489, 0.0
      %v615 = vadd.f32 %v613, %v614
      %v616 = vsel %vm548, %v494, 0.0
      %v617 = vadd.f32 %v615, %v616
      %v618 = vsel %vm548, %v497, 0.0
      %v619 = vadd.f32 %v617, %v618
      %v620 = vsel %vm548, %v502, 0.0
      %v621 = vadd.f32 %v619, %v620
      %v622 = vsel %vm548, %v505, 0.0
      %v623 = vadd.f32 %v621, %v622
      %v624 = vsel %vm548, %v510, 0.0
      %v625 = vadd.f32 %v623, %v624
      %v626 = vsel %vm548, %v513, 0.0
      %v627 = vadd.f32 %v625, %v626
      %v628 = vsel %vm548, %v518, 0.0
      %v629 = vadd.f32 %v627, %v628
      %v630 = vsel %vm548, %v521, 0.0
      %v631 = vadd.f32 %v629, %v630
      %v632 = vsel %vm548, %v526, 0.0
      %v633 = vadd.f32 %v631, %v632
      %v634 = vsel %vm548, %v529, 0.0
      %v635 = vadd.f32 %v633, %v634
      %v636 = vsel %vm548, %v534, 0.0
      %v637 = vadd.f32 %v635, %v636
      %v638 = vsel %vm548, %v537, 0.0
      %v639 = vadd.f32 %v637, %v638
      %v640 = vsel %vm548, %v542, 0.0
      %v641 = vadd.f32 %v639, %v640
      %v642 = vsel %vm548, %v545, 0.0
      %v643 = vadd.f32 %v641, %v642
      %v644 = vrot.slane %v643, 4
      %v645 = vadd.f32 %v643, %v644
      %v646 = vrot.slane %v645, 2
      %v647 = vadd.f32 %v645, %v646
      %v648 = vrot.slane %v647, 1
      %v649 = vadd.f32 %v647, %v648
      %v650 = vmul.f32 %v422, %v422
      %v651 = vmul.f32 %v425, %v425
      %v652 = vmul.f32 %v430, %v430
      %v653 = vmul.f32 %v433, %v433
      %v654 = vmul.f32 %v438, %v438
      %v655 = vmul.f32 %v441, %v441
      %v656 = vmul.f32 %v446, %v446
      %v657 = vmul.f32 %v449, %v449
      %v658 = vmul.f32 %v454, %v454
      %v659 = vmul.f32 %v457, %v457
      %v660 = vmul.f32 %v462, %v462
      %v661 = vmul.f32 %v465, %v465
      %v662 = vmul.f32 %v470, %v470
      %v663 = vmul.f32 %v473, %v473
      %v664 = vmul.f32 %v478, %v478
      %v665 = vmul.f32 %v481, %v481
      %v666 = vmul.f32 %v486, %v486
      %v667 = vmul.f32 %v489, %v489
      %v668 = vmul.f32 %v494, %v494
      %v669 = vmul.f32 %v497, %v497
      %v670 = vmul.f32 %v502, %v502
      %v671 = vmul.f32 %v505, %v505
      %v672 = vmul.f32 %v510, %v510
      %v673 = vmul.f32 %v513, %v513
      %v674 = vmul.f32 %v518, %v518
      %v675 = vmul.f32 %v521, %v521
      %v676 = vmul.f32 %v526, %v526
      %v677 = vmul.f32 %v529, %v529
      %v678 = vmul.f32 %v534, %v534
      %v679 = vmul.f32 %v537, %v537
      %v680 = vmul.f32 %v542, %v542
      %v681 = vmul.f32 %v545, %v545
      %v682 = vsel %vm548, %v650, 0.0
      %v683 = vsel %vm548, %v651, 0.0
      %v684 = vadd.f32 %v682, %v683
      %v685 = vsel %vm548, %v652, 0.0
      %v686 = vadd.f32 %v684, %v685
      %v687 = vsel %vm548, %v653, 0.0
      %v688 = vadd.f32 %v686, %v687
      %v689 = vsel %vm548, %v654, 0.0
      %v690 = vadd.f32 %v688, %v689
      %v691 = vsel %vm548, %v655, 0.0
      %v692 = vadd.f32 %v690, %v691
      %v693 = vsel %vm548, %v656, 0.0
      %v694 = vadd.f32 %v692, %v693
      %v695 = vsel %vm548, %v657, 0.0
      %v696 = vadd.f32 %v694, %v695
      %v697 = vsel %vm548, %v658, 0.0
      %v698 = vadd.f32 %v696, %v697
      %v699 = vsel %vm548, %v659, 0.0
      %v700 = vadd.f32 %v698, %v699
      %v701 = vsel %vm548, %v660, 0.0
      %v702 = vadd.f32 %v700, %v701
      %v703 = vsel %vm548, %v661, 0.0
      %v704 = vadd.f32 %v702, %v703
      %v705 = vsel %vm548, %v662, 0.0
      %v706 = vadd.f32 %v704, %v705
      %v707 = vsel %vm548, %v663, 0.0
      %v708 = vadd.f32 %v706, %v707
      %v709 = vsel %vm548, %v664, 0.0
      %v710 = vadd.f32 %v708, %v709
      %v711 = vsel %vm548, %v665, 0.0
      %v712 = vadd.f32 %v710, %v711
      %v713 = vsel %vm548, %v666, 0.0
      %v714 = vadd.f32 %v712, %v713
      %v715 = vsel %vm548, %v667, 0.0
      %v716 = vadd.f32 %v714, %v715
      %v717 = vsel %vm548, %v668, 0.0
      %v718 = vadd.f32 %v716, %v717
      %v719 = vsel %vm548, %v669, 0.0
      %v720 = vadd.f32 %v718, %v719
      %v721 = vsel %vm548, %v670, 0.0
      %v722 = vadd.f32 %v720, %v721
      %v723 = vsel %vm548, %v671, 0.0
      %v724 = vadd.f32 %v722, %v723
      %v725 = vsel %vm548, %v672, 0.0
      %v726 = vadd.f32 %v724, %v725
      %v727 = vsel %vm548, %v673, 0.0
      %v728 = vadd.f32 %v726, %v727
      %v729 = vsel %vm548, %v674, 0.0
      %v730 = vadd.f32 %v728, %v729
      %v731 = vsel %vm548, %v675, 0.0
      %v732 = vadd.f32 %v730, %v731
      %v733 = vsel %vm548, %v676, 0.0
      %v734 = vadd.f32 %v732, %v733
      %v735 = vsel %vm548, %v677, 0.0
      %v736 = vadd.f32 %v734, %v735
      %v737 = vsel %vm548, %v678, 0.0
      %v738 = vadd.f32 %v736, %v737
      %v739 = vsel %vm548, %v679, 0.0
      %v740 = vadd.f32 %v738, %v739
      %v741 = vsel %vm548, %v680, 0.0
      %v742 = vadd.f32 %v740, %v741
      %v743 = vsel %vm548, %v681, 0.0
      %v744 = vadd.f32 %v742, %v743
      %v745 = vrot.slane %v744, 4
      %v746 = vadd.f32 %v744, %v745
      %v747 = vrot.slane %v746, 2
      %v748 = vadd.f32 %v746, %v747
      %v749 = vrot.slane %v748, 1
      %v750 = vadd.f32 %v748, %v749
      %v751 = vlaneseq
      %v752 = vshrl.u32 %v751, 7
      %vm753 = vcmp.eq.s32.totalorder %v752, 0
      %vm754 = vcmp.eq.s32.totalorder %v752, 1
      %v755 = vsel %vm754, %v750, 0.0
      %v756 = vsel %vm753, %v649, %v755
      %757 = vst.msk [vmem:[%s184] sm:$0xff] %vm548, %v756
      %s758 = smul.u32 32, %s15
      %p759 = scmp.lt.s32.totalorder %s758, 63
      %s760 = scalar_select %p759, %s758, 63
      %s761 = smul.addr %s760, 8
      %s762 = scalar_lea.vmem %s2, %s761
      %p763 = scmp.lt.s32.totalorder %s15, 1
      %s764 = scalar_select %p763, %s15, 1
      %s765 = smul.addr %s764, 8
      %s766 = scalar_lea.vmem %s3, %s765
      // Predicated region
      $region29: #{res_trans_block.7} parent=27 // pred_check
        %p767 = pneg %p80
      $region30: #{res_trans_block.7} parent=27 // pred_check_branch
        %769 = sbr.rel (%p767) target = $region32
      $region31: #{res_trans_block.7} parent=27 // pred_region
        %s770 = smul.u32 32, %s15
      $region32: #{res_trans_block.7} parent=27 // pred_fallthru
        _
      // Predicated region
      $region33: #{res_trans_block.7} parent=27 // pred_check
        %p771 = pneg %p106
      $region34: #{res_trans_block.7} parent=27 // pred_check_branch
        %773 = sbr.rel (%p771) target = $region36
      $region35: #{res_trans_block.7} parent=27 // pred_region
        _
      $region36: #{res_trans_block.7} parent=27 // pred_fallthru
        _
    $region28: #{res_trans_block.7} parent=5 // pred_fallthru
      _
    %p774 = scmp.le.s32.totalorder 2, %s10
    // Predicated region
    $region37: #{res_trans_block.7} parent=5 // pred_check
      %p775 = pneg %p774
    $region38: #{res_trans_block.7} parent=5 // pred_check_branch
      %777 = sbr.rel (%p775) target = $region40
    $region39: #{res_trans_block.7} parent=5 // pred_region
      %s778 = ssub.s32 %s10, 2
      // Predicated region
      $region41: #{res_trans_block.7} parent=39 // pred_check
        %p779 = pneg %p86
      $region42: #{res_trans_block.7} parent=39 // pred_check_branch
        %781 = sbr.rel (%p779) target = $region44
      $region43: #{res_trans_block.7} parent=39 // pred_region
        %s782 = smul.u32 32, %s16
        %p783 = scmp.lt.s32.totalorder %s782, 63
        %s784 = scalar_select %p783, %s782, 63
        %s785 = smul.addr %s784, 8
        %s786 = scalar_lea.vmem %s2, %s785
      $region44: #{res_trans_block.7} parent=39 // pred_fallthru
        _
      // Predicated region
      $region45: #{res_trans_block.7} parent=39 // pred_check
        %p787 = pneg %p112
      $region46: #{res_trans_block.7} parent=39 // pred_check_branch
        %789 = sbr.rel (%p787) target = $region48
      $region47: #{res_trans_block.7} parent=39 // pred_region
        %p790 = scmp.lt.s32.totalorder %s16, 1
        %s791 = scalar_select %p790, %s16, 1
        %s792 = smul.addr %s791, 8
        %s793 = scalar_lea.vmem %s3, %s792
      $region48: #{res_trans_block.7} parent=39 // pred_fallthru
        _
    $region40: #{res_trans_block.7} parent=5 // pred_fallthru
      _
  $region6: #{res_trans_block.7} parent=0 // loop_footer
    %s14 = sadd.s32 1, %s10
  $region7: #{res_trans_block.7} parent=0 // loop_footer_branch
    %9 = sbr.rel target = $region3
  $region8: #{res_trans_block.7} parent=0 // loop_exit
    _

// kernel: res_trans_block.8
$region0: #{res_trans_block.8}
  #allocation0 [shape = 'u32[]', space=smem, size = 0x4, offset = 0x4, fixed_abs, tag = 'smem constant byte address 0x4 - core index']
  #allocation1 [shape = 'u32[144,128]{1,0:T(1,128)}', space=vmem, size = 0x12000, scoped, tag = 'internal scratch']
  %s0 = inlined_call_operand.vmem [shape: bf16[128,16], index: 0, kind: input, shape index: {}]
  %s1 = inlined_call_operand.vmem [shape: bf16[16,64], index: 1, kind: input, shape index: {}]
  %s2 = inlined_call_operand.vmem [shape: f32[128,64], index: 2, kind: output, shape index: {0}]
  %s3 = inlined_call_operand.vmem [shape: f32[8,64], index: 3, kind: output, shape index: {1}]
  %4 = xla_tuple %s2, %s3
  %s5 = sld [smem:[#allocation0]]
  $region26: #{res_trans_block.8} parent=0
    _
  %s7 = ssub.s32 1, %s5
  %s8 = scalar_select 0, %s7, %s5
  // Predicated region
  $region2: #{res_trans_block.8} parent=0 // pred_check
    _
  $region3: #{res_trans_block.8} parent=0 // pred_check_branch
    %10 = sbr.rel (0) target = $region5
  $region4: #{res_trans_block.8} parent=0 // pred_region
    _
  $region5: #{res_trans_block.8} parent=0 // pred_fallthru
    _
  // Predicated region
  $region6: #{res_trans_block.8} parent=0 // pred_check
    _
  $region7: #{res_trans_block.8} parent=0 // pred_check_branch
    %12 = sbr.rel (0) target = $region9
  $region8: #{res_trans_block.8} parent=0 // pred_region
    _
  $region9: #{res_trans_block.8} parent=0 // pred_fallthru
    _
  %v14 = vld [vmem:[%s0] sm:$0xf]
  %v15 = vld [vmem:[%s0 + $0x4] sm:$0xf]
  %v16 = vld [vmem:[%s0 + $0x8] sm:$0xf]
  %v17 = vld [vmem:[%s0 + $0xc] sm:$0xf]
  %v18 = vld [vmem:[%s0 + $0x10] sm:$0xf]
  %v19 = vld [vmem:[%s0 + $0x14] sm:$0xf]
  %v20 = vld [vmem:[%s0 + $0x18] sm:$0xf]
  %v21 = vld [vmem:[%s0 + $0x1c] sm:$0xf]
  %v22 = vld [vmem:[%s0 + $0x20] sm:$0xf]
  %v23 = vld [vmem:[%s0 + $0x24] sm:$0xf]
  %v24 = vld [vmem:[%s0 + $0x28] sm:$0xf]
  %v25 = vld [vmem:[%s0 + $0x2c] sm:$0xf]
  %v26 = vld [vmem:[%s0 + $0x30] sm:$0xf]
  %v27 = vld [vmem:[%s0 + $0x34] sm:$0xf]
  %v28 = vld [vmem:[%s0 + $0x38] sm:$0xf]
  %v29 = vld [vmem:[%s0 + $0x3c] sm:$0xf]
  %v30 = vld [vmem:[%s1] sm:$0xf]
  %v31 = vld [vmem:[%s1 + $0x4] sm:$0xf]
  %v48 = vunpack.c.l.b16 %v14
  %v49 = vunpack.c.l.b16 %v15
  %v50 = vunpack.c.l.b16 %v16
  %v51 = vunpack.c.l.b16 %v17
  %v52 = vunpack.c.l.b16 %v18
  %v53 = vunpack.c.l.b16 %v19
  %v54 = vunpack.c.l.b16 %v20
  %v55 = vunpack.c.l.b16 %v21
  %v56 = vunpack.c.l.b16 %v22
  %v57 = vunpack.c.l.b16 %v23
  %v58 = vunpack.c.l.b16 %v24
  %v59 = vunpack.c.l.b16 %v25
  %v60 = vunpack.c.l.b16 %v26
  %v61 = vunpack.c.l.b16 %v27
  %v62 = vunpack.c.l.b16 %v28
  %v63 = vunpack.c.l.b16 %v29
  %v64 = vpack.c.b16 %v49, %v48
  %v65 = vpack.c.b16 %v51, %v50
  %v66 = vpack.c.b16 %v53, %v52
  %v67 = vpack.c.b16 %v55, %v54
  %v68 = vpack.c.b16 %v57, %v56
  %v69 = vpack.c.b16 %v59, %v58
  %v70 = vpack.c.b16 %v61, %v60
  %v71 = vpack.c.b16 %v63, %v62
  %v74 = vunpack.c.l.b16 %v30
  %v75 = vunpack.c.l.b16 %v31
  %v76 = vpack.c.b16 %v75, %v74
  %vm78 = vcmask 130048
  %v80 = vsel %vm78, %v64, 0
  %v83 = vsel %vm78, %v65, 0
  %v86 = vsel %vm78, %v66, 0
  %v89 = vsel %vm78, %v67, 0
  %v92 = vsel %vm78, %v68, 0
  %v95 = vsel %vm78, %v69, 0
  %v98 = vsel %vm78, %v70, 0
  %v101 = vsel %vm78, %v71, 0
  %103 = vmatprep.subr.bf16.mxu0 0
  %104 = vmatpush1.bf16.msra.mxu0 %v76
  %105 = vmatprep.subr.bf16.mxu0 0
  %106 = vmatpush1.bf16.msra.mxu0 0
  %107 = vmatprep.subr.bf16.mxu0 0
  %108 = vmatpush1.bf16.msra.mxu0 0
  %109 = vmatprep.subr.bf16.mxu0 0
  %110 = vmatpush1.bf16.msra.mxu0 0
  %111 = vmatprep.subr.bf16.mxu0 0
  %112 = vmatpush1.bf16.msra.mxu0 0
  %113 = vmatprep.subr.bf16.mxu0 0
  %114 = vmatpush1.bf16.msra.mxu0 0
  %115 = vmatprep.subr.bf16.mxu0 0
  %116 = vmatpush1.bf16.msra.mxu0 0
  %117 = vmatprep.subr.bf16.mxu0 0
  %118 = vmatpush1.bf16.msra.mxu0 0
  %119 = vmatprep.subr.bf16.mxu0 0
  %120 = vmatpush1.bf16.msra.mxu0 0
  %121 = vmatprep.subr.bf16.mxu0 0
  %122 = vmatpush1.bf16.msra.mxu0 0
  %123 = vmatprep.subr.bf16.mxu0 0
  %124 = vmatpush1.bf16.msra.mxu0 0
  %125 = vmatprep.subr.bf16.mxu0 0
  %126 = vmatpush1.bf16.msra.mxu0 0
  %127 = vmatprep.subr.bf16.mxu0 0
  %128 = vmatpush1.bf16.msra.mxu0 0
  %129 = vmatprep.subr.bf16.mxu0 0
  %130 = vmatpush1.bf16.msra.mxu0 0
  %131 = vmatprep.subr.bf16.mxu0 0
  %132 = vmatpush1.bf16.msra.mxu0 0
  %133 = vmatprep.subr.bf16.mxu0 0
  %134 = vmatpush1.bf16.msra.mxu0 0
  %135 = vmatprep.mubr.bf16.mxu0 0
  %136 = vmatmul.mubr.bf16.gmra.mrb[0].mxu0 %v80
  %v137 = vpop.f32.mrb[0].mxu0
  %v138 = vadd.f32 0.0, %v137
  %v139 = vpop.f32.mrb[0].mxu0
  %v140 = vpop.f32.mrb[0].mxu0
  %v141 = vadd.f32 0.0, %v140
  %v142 = vpop.f32.mrb[0].mxu0
  %143 = vmatprep.mubr.bf16.mxu0 0
  %144 = vmatmul.mubr.bf16.gmra.mrb[0].mxu0 %v83
  %v145 = vpop.f32.mrb[0].mxu0
  %v146 = vadd.f32 0.0, %v145
  %v147 = vpop.f32.mrb[0].mxu0
  %v148 = vpop.f32.mrb[0].mxu0
  %v149 = vadd.f32 0.0, %v148
  %v150 = vpop.f32.mrb[0].mxu0
  %151 = vmatprep.mubr.bf16.mxu0 0
  %152 = vmatmul.mubr.bf16.gmra.mrb[0].mxu0 %v86
  %v153 = vpop.f32.mrb[0].mxu0
  %v154 = vadd.f32 0.0, %v153
  %v155 = vpop.f32.mrb[0].mxu0
  %v156 = vpop.f32.mrb[0].mxu0
  %v157 = vadd.f32 0.0, %v156
  %v158 = vpop.f32.mrb[0].mxu0
  %159 = vmatprep.mubr.bf16.mxu0 0
  %160 = vmatmul.mubr.bf16.gmra.mrb[0].mxu0 %v89
  %v161 = vpop.f32.mrb[0].mxu0
  %v162 = vadd.f32 0.0, %v161
  %v163 = vpop.f32.mrb[0].mxu0
  %v164 = vpop.f32.mrb[0].mxu0
  %v165 = vadd.f32 0.0, %v164
  %v166 = vpop.f32.mrb[0].mxu0
  %167 = vmatprep.mubr.bf16.mxu0 0
  %168 = vmatmul.mubr.bf16.gmra.mrb[0].mxu0 %v92
  %v169 = vpop.f32.mrb[0].mxu0
  %v170 = vadd.f32 0.0, %v169
  %v171 = vpop.f32.mrb[0].mxu0
  %v172 = vpop.f32.mrb[0].mxu0
  %v173 = vadd.f32 0.0, %v172
  %v174 = vpop.f32.mrb[0].mxu0
  %175 = vmatprep.mubr.bf16.mxu0 0
  %176 = vmatmul.mubr.bf16.gmra.mrb[0].mxu0 %v95
  %v177 = vpop.f32.mrb[0].mxu0
  %v178 = vadd.f32 0.0, %v177
  %v179 = vpop.f32.mrb[0].mxu0
  %v180 = vpop.f32.mrb[0].mxu0
  %v181 = vadd.f32 0.0, %v180
  %v182 = vpop.f32.mrb[0].mxu0
  %183 = vmatprep.mubr.bf16.mxu0 0
  %184 = vmatmul.mubr.bf16.gmra.mrb[0].mxu0 %v98
  %v185 = vpop.f32.mrb[0].mxu0
  %v186 = vadd.f32 0.0, %v185
  %v187 = vpop.f32.mrb[0].mxu0
  %v188 = vpop.f32.mrb[0].mxu0
  %v189 = vadd.f32 0.0, %v188
  %v190 = vpop.f32.mrb[0].mxu0
  %191 = vmatprep.mubr.bf16.mxu0 0
  %192 = vmatmul.mubr.bf16.gmra.mrb[0].mxu0 %v101
  %v193 = vpop.f32.mrb[0].mxu0
  %v194 = vadd.f32 0.0, %v193
  %v195 = vpop.f32.mrb[0].mxu0
  %v196 = vpop.f32.mrb[0].mxu0
  %v197 = vadd.f32 0.0, %v196
  %v198 = vpop.f32.mrb[0].mxu0
  %199 = vdwg.mxu0
  %vm200 = vcmask 523264
  %201 = vst.msk [vmem:[%s2] sm:$0xff] %vm200, %v138
  %202 = vst.msk [vmem:[%s2 + $0x8] sm:$0xff] %vm200, %v141
  %203 = vst.msk [vmem:[%s2 + $0x10] sm:$0xff] %vm200, %v146
  %204 = vst.msk [vmem:[%s2 + $0x18] sm:$0xff] %vm200, %v149
  %205 = vst.msk [vmem:[%s2 + $0x20] sm:$0xff] %vm200, %v154
  %206 = vst.msk [vmem:[%s2 + $0x28] sm:$0xff] %vm200, %v157
  %207 = vst.msk [vmem:[%s2 + $0x30] sm:$0xff] %vm200, %v162
  %208 = vst.msk [vmem:[%s2 + $0x38] sm:$0xff] %vm200, %v165
  %209 = vst.msk [vmem:[%s2 + $0x40] sm:$0xff] %vm200, %v170
  %210 = vst.msk [vmem:[%s2 + $0x48] sm:$0xff] %vm200, %v173
  %211 = vst.msk [vmem:[%s2 + $0x50] sm:$0xff] %vm200, %v178
  %212 = vst.msk [vmem:[%s2 + $0x58] sm:$0xff] %vm200, %v181
  %213 = vst.msk [vmem:[%s2 + $0x60] sm:$0xff] %vm200, %v186
  %214 = vst.msk [vmem:[%s2 + $0x68] sm:$0xff] %vm200, %v189
  %215 = vst.msk [vmem:[%s2 + $0x70] sm:$0xff] %vm200, %v194
  %216 = vst.msk [vmem:[%s2 + $0x78] sm:$0xff] %vm200, %v197
  %v217 = vsel %vm200, %v138, 0.0
  %v218 = vsel %vm200, %v141, 0.0
  %v219 = vadd.f32 %v217, %v218
  %v220 = vsel %vm200, %v146, 0.0
  %v221 = vadd.f32 %v219, %v220
  %v222 = vsel %vm200, %v149, 0.0
  %v223 = vadd.f32 %v221, %v222
  %v224 = vsel %vm200, %v154, 0.0
  %v225 = vadd.f32 %v223, %v224
  %v226 = vsel %vm200, %v157, 0.0
  %v227 = vadd.f32 %v225, %v226
  %v228 = vsel %vm200, %v162, 0.0
  %v229 = vadd.f32 %v227, %v228
  %v230 = vsel %vm200, %v165, 0.0
  %v231 = vadd.f32 %v229, %v230
  %v232 = vsel %vm200, %v170, 0.0
  %v233 = vadd.f32 %v231, %v232
  %v234 = vsel %vm200, %v173, 0.0
  %v235 = vadd.f32 %v233, %v234
  %v236 = vsel %vm200, %v178, 0.0
  %v237 = vadd.f32 %v235, %v236
  %v238 = vsel %vm200, %v181, 0.0
  %v239 = vadd.f32 %v237, %v238
  %v240 = vsel %vm200, %v186, 0.0
  %v241 = vadd.f32 %v239, %v240
  %v242 = vsel %vm200, %v189, 0.0
  %v243 = vadd.f32 %v241, %v242
  %v244 = vsel %vm200, %v194, 0.0
  %v245 = vadd.f32 %v243, %v244
  %v246 = vsel %vm200, %v197, 0.0
  %v247 = vadd.f32 %v245, %v246
  %v248 = vrot.slane %v247, 4
  %v249 = vadd.f32 %v247, %v248
  %v250 = vrot.slane %v249, 2
  %v251 = vadd.f32 %v249, %v250
  %v252 = vrot.slane %v251, 1
  %v253 = vadd.f32 %v251, %v252
  %v254 = vmul.f32 %v138, %v138
  %v255 = vmul.f32 %v141, %v141
  %v256 = vmul.f32 %v146, %v146
  %v257 = vmul.f32 %v149, %v149
  %v258 = vmul.f32 %v154, %v154
  %v259 = vmul.f32 %v157, %v157
  %v260 = vmul.f32 %v162, %v162
  %v261 = vmul.f32 %v165, %v165
  %v262 = vmul.f32 %v170, %v170
  %v263 = vmul.f32 %v173, %v173
  %v264 = vmul.f32 %v178, %v178
  %v265 = vmul.f32 %v181, %v181
  %v266 = vmul.f32 %v186, %v186
  %v267 = vmul.f32 %v189, %v189
  %v268 = vmul.f32 %v194, %v194
  %v269 = vmul.f32 %v197, %v197
  %v270 = vsel %vm200, %v254, 0.0
  %v271 = vsel %vm200, %v255, 0.0
  %v272 = vadd.f32 %v270, %v271
  %v273 = vsel %vm200, %v256, 0.0
  %v274 = vadd.f32 %v272, %v273
  %v275 = vsel %vm200, %v257, 0.0
  %v276 = vadd.f32 %v274, %v275
  %v277 = vsel %vm200, %v258, 0.0
  %v278 = vadd.f32 %v276, %v277
  %v279 = vsel %vm200, %v259, 0.0
  %v280 = vadd.f32 %v278, %v279
  %v281 = vsel %vm200, %v260, 0.0
  %v282 = vadd.f32 %v280, %v281
  %v283 = vsel %vm200, %v261, 0.0
  %v284 = vadd.f32 %v282, %v283
  %v285 = vsel %vm200, %v262, 0.0
  %v286 = vadd.f32 %v284, %v285
  %v287 = vsel %vm200, %v263, 0.0
  %v288 = vadd.f32 %v286, %v287
  %v289 = vsel %vm200, %v264, 0.0
  %v290 = vadd.f32 %v288, %v289
  %v291 = vsel %vm200, %v265, 0.0
  %v292 = vadd.f32 %v290, %v291
  %v293 = vsel %vm200, %v266, 0.0
  %v294 = vadd.f32 %v292, %v293
  %v295 = vsel %vm200, %v267, 0.0
  %v296 = vadd.f32 %v294, %v295
  %v297 = vsel %vm200, %v268, 0.0
  %v298 = vadd.f32 %v296, %v297
  %v299 = vsel %vm200, %v269, 0.0
  %v300 = vadd.f32 %v298, %v299
  %v301 = vrot.slane %v300, 4
  %v302 = vadd.f32 %v300, %v301
  %v303 = vrot.slane %v302, 2
  %v304 = vadd.f32 %v302, %v303
  %v305 = vrot.slane %v304, 1
  %v306 = vadd.f32 %v304, %v305
  %v307 = vlaneseq
  %v308 = vshrl.u32 %v307, 7
  %vm309 = vcmp.eq.s32.totalorder %v308, 0
  %vm310 = vcmp.eq.s32.totalorder %v308, 1
  %v311 = vsel %vm310, %v306, 0.0
  %v312 = vsel %vm309, %v253, %v311
  %313 = vst.msk [vmem:[%s3] sm:$0xff] %vm200, %v312
  // Predicated region
  $region10: #{res_trans_block.8} parent=0 // pred_check
    _
  $region11: #{res_trans_block.8} parent=0 // pred_check_branch
    %315 = sbr.rel (0) target = $region13
  $region12: #{res_trans_block.8} parent=0 // pred_region
    _
  $region13: #{res_trans_block.8} parent=0 // pred_fallthru
    _
  // Predicated region
  $region14: #{res_trans_block.8} parent=0 // pred_check
    _
  $region15: #{res_trans_block.8} parent=0 // pred_check_branch
    %317 = sbr.rel (0) target = $region17
  $region16: #{res_trans_block.8} parent=0 // pred_region
    _
  $region17: #{res_trans_block.8} parent=0 // pred_fallthru
    _
  // Predicated region
  $region18: #{res_trans_block.8} parent=0 // pred_check
    _
  $region19: #{res_trans_block.8} parent=0 // pred_check_branch
    %319 = sbr.rel (0) target = $region21
  $region20: #{res_trans_block.8} parent=0 // pred_region
    _
  $region21: #{res_trans_block.8} parent=0 // pred_fallthru
    _
  // Predicated region
  $region22: #{res_trans_block.8} parent=0 // pred_check
    _
  $region23: #{res_trans_block.8} parent=0 // pred_check_branch
    %321 = sbr.rel (0) target = $region25
  $region24: #{res_trans_block.8} parent=0 // pred_region
    _
  $region25: #{res_trans_block.8} parent=0 // pred_fallthru
    _

// kernel: res_trans_block.9
$region0: #{res_trans_block.9}
  #allocation0 [shape = 'u32[]', space=smem, size = 0x4, offset = 0x4, fixed_abs, tag = 'smem constant byte address 0x4 - core index']
  #allocation1 [shape = 'u32[144,128]{1,0:T(1,128)}', space=vmem, size = 0x12000, scoped, tag = 'internal scratch']
  %s0 = inlined_call_operand.vmem [shape: f32[128,64], index: 0, kind: input, shape index: {}]
  %s1 = inlined_call_operand.vmem [shape: f32[1,64], index: 1, kind: input, shape index: {}]
  %s2 = inlined_call_operand.vmem [shape: f32[1,64], index: 2, kind: input, shape index: {}]
  %s3 = inlined_call_operand.vmem [shape: f32[128,64], index: 3, kind: input, shape index: {}]
  %s4 = inlined_call_operand.vmem [shape: f32[1,64], index: 4, kind: input, shape index: {}]
  %s5 = inlined_call_operand.vmem [shape: f32[1,64], index: 5, kind: input, shape index: {}]
  %s6 = inlined_call_operand.vmem [shape: f32[128,64], index: 6, kind: output, shape index: {}]
  %s7 = sld [smem:[#allocation0]]
  $region34: #{res_trans_block.9} parent=0
    _
  %s9 = ssub.s32 1, %s7
  %s10 = scalar_select 0, %s9, %s7
  // Predicated region
  $region2: #{res_trans_block.9} parent=0 // pred_check
    _
  $region3: #{res_trans_block.9} parent=0 // pred_check_branch
    %12 = sbr.rel (0) target = $region5
  $region4: #{res_trans_block.9} parent=0 // pred_region
    _
  $region5: #{res_trans_block.9} parent=0 // pred_fallthru
    _
  // Predicated region
  $region6: #{res_trans_block.9} parent=0 // pred_check
    _
  $region7: #{res_trans_block.9} parent=0 // pred_check_branch
    %14 = sbr.rel (0) target = $region9
  $region8: #{res_trans_block.9} parent=0 // pred_region
    _
  $region9: #{res_trans_block.9} parent=0 // pred_fallthru
    _
  // Predicated region
  $region10: #{res_trans_block.9} parent=0 // pred_check
    _
  $region11: #{res_trans_block.9} parent=0 // pred_check_branch
    %16 = sbr.rel (0) target = $region13
  $region12: #{res_trans_block.9} parent=0 // pred_region
    _
  $region13: #{res_trans_block.9} parent=0 // pred_fallthru
    _
  // Predicated region
  $region14: #{res_trans_block.9} parent=0 // pred_check
    _
  $region15: #{res_trans_block.9} parent=0 // pred_check_branch
    %18 = sbr.rel (0) target = $region17
  $region16: #{res_trans_block.9} parent=0 // pred_region
    _
  $region17: #{res_trans_block.9} parent=0 // pred_fallthru
    _
  // Predicated region
  $region18: #{res_trans_block.9} parent=0 // pred_check
    _
  $region19: #{res_trans_block.9} parent=0 // pred_check_branch
    %20 = sbr.rel (0) target = $region21
  $region20: #{res_trans_block.9} parent=0 // pred_region
    _
  $region21: #{res_trans_block.9} parent=0 // pred_fallthru
    _
  // Predicated region
  $region22: #{res_trans_block.9} parent=0 // pred_check
    _
  $region23: #{res_trans_block.9} parent=0 // pred_check_branch
    %22 = sbr.rel (0) target = $region25
  $region24: #{res_trans_block.9} parent=0 // pred_region
    _
  $region25: #{res_trans_block.9} parent=0 // pred_fallthru
    _
  %v23 = vld [vmem:[%s0] sm:$0xff]
  %v24 = vld [vmem:[%s0 + $0x8] sm:$0xff]
  %v25 = vld [vmem:[%s0 + $0x10] sm:$0xff]
  %v26 = vld [vmem:[%s0 + $0x18] sm:$0xff]
  %v27 = vld [vmem:[%s0 + $0x20] sm:$0xff]
  %v28 = vld [vmem:[%s0 + $0x28] sm:$0xff]
  %v29 = vld [vmem:[%s0 + $0x30] sm:$0xff]
  %v30 = vld [vmem:[%s0 + $0x38] sm:$0xff]
  %v31 = vld [vmem:[%s0 + $0x40] sm:$0xff]
  %v32 = vld [vmem:[%s0 + $0x48] sm:$0xff]
  %v33 = vld [vmem:[%s0 + $0x50] sm:$0xff]
  %v34 = vld [vmem:[%s0 + $0x58] sm:$0xff]
  %v35 = vld [vmem:[%s0 + $0x60] sm:$0xff]
  %v36 = vld [vmem:[%s0 + $0x68] sm:$0xff]
  %v37 = vld [vmem:[%s0 + $0x70] sm:$0xff]
  %v38 = vld [vmem:[%s0 + $0x78] sm:$0xff]
  %v39 = vld [vmem:[%s1] sm:$0x1]
  %v41 = vlaneseq
  %v42 = vshrl.u32 %v41, 7
  %v43 = vsub.s32 0, %v42
  %v44 = vrot.slane %v39, %v43
  %v46 = vmul.f32 %v23, %v44
  %v47 = vmul.f32 %v24, %v44
  %v48 = vmul.f32 %v25, %v44
  %v49 = vmul.f32 %v26, %v44
  %v50 = vmul.f32 %v27, %v44
  %v51 = vmul.f32 %v28, %v44
  %v52 = vmul.f32 %v29, %v44
  %v53 = vmul.f32 %v30, %v44
  %v54 = vmul.f32 %v31, %v44
  %v55 = vmul.f32 %v32, %v44
  %v56 = vmul.f32 %v33, %v44
  %v57 = vmul.f32 %v34, %v44
  %v58 = vmul.f32 %v35, %v44
  %v59 = vmul.f32 %v36, %v44
  %v60 = vmul.f32 %v37, %v44
  %v61 = vmul.f32 %v38, %v44
  %v62 = vld [vmem:[%s2] sm:$0x1]
  %v64 = vlaneseq
  %v65 = vshrl.u32 %v64, 7
  %v66 = vsub.s32 0, %v65
  %v67 = vrot.slane %v62, %v66
  %v69 = vadd.f32 %v46, %v67
  %v70 = vadd.f32 %v47, %v67
  %v71 = vadd.f32 %v48, %v67
  %v72 = vadd.f32 %v49, %v67
  %v73 = vadd.f32 %v50, %v67
  %v74 = vadd.f32 %v51, %v67
  %v75 = vadd.f32 %v52, %v67
  %v76 = vadd.f32 %v53, %v67
  %v77 = vadd.f32 %v54, %v67
  %v78 = vadd.f32 %v55, %v67
  %v79 = vadd.f32 %v56, %v67
  %v80 = vadd.f32 %v57, %v67
  %v81 = vadd.f32 %v58, %v67
  %v82 = vadd.f32 %v59, %v67
  %v83 = vadd.f32 %v60, %v67
  %v84 = vadd.f32 %v61, %v67
  %v85 = vld [vmem:[%s3] sm:$0xff]
  %v86 = vld [vmem:[%s3 + $0x8] sm:$0xff]
  %v87 = vld [vmem:[%s3 + $0x10] sm:$0xff]
  %v88 = vld [vmem:[%s3 + $0x18] sm:$0xff]
  %v89 = vld [vmem:[%s3 + $0x20] sm:$0xff]
  %v90 = vld [vmem:[%s3 + $0x28] sm:$0xff]
  %v91 = vld [vmem:[%s3 + $0x30] sm:$0xff]
  %v92 = vld [vmem:[%s3 + $0x38] sm:$0xff]
  %v93 = vld [vmem:[%s3 + $0x40] sm:$0xff]
  %v94 = vld [vmem:[%s3 + $0x48] sm:$0xff]
  %v95 = vld [vmem:[%s3 + $0x50] sm:$0xff]
  %v96 = vld [vmem:[%s3 + $0x58] sm:$0xff]
  %v97 = vld [vmem:[%s3 + $0x60] sm:$0xff]
  %v98 = vld [vmem:[%s3 + $0x68] sm:$0xff]
  %v99 = vld [vmem:[%s3 + $0x70] sm:$0xff]
  %v100 = vld [vmem:[%s3 + $0x78] sm:$0xff]
  %v101 = vld [vmem:[%s4] sm:$0x1]
  %v103 = vlaneseq
  %v104 = vshrl.u32 %v103, 7
  %v105 = vsub.s32 0, %v104
  %v106 = vrot.slane %v101, %v105
  %v108 = vmul.f32 %v85, %v106
  %v109 = vmul.f32 %v86, %v106
  %v110 = vmul.f32 %v87, %v106
  %v111 = vmul.f32 %v88, %v106
  %v112 = vmul.f32 %v89, %v106
  %v113 = vmul.f32 %v90, %v106
  %v114 = vmul.f32 %v91, %v106
  %v115 = vmul.f32 %v92, %v106
  %v116 = vmul.f32 %v93, %v106
  %v117 = vmul.f32 %v94, %v106
  %v118 = vmul.f32 %v95, %v106
  %v119 = vmul.f32 %v96, %v106
  %v120 = vmul.f32 %v97, %v106
  %v121 = vmul.f32 %v98, %v106
  %v122 = vmul.f32 %v99, %v106
  %v123 = vmul.f32 %v100, %v106
  %v124 = vadd.f32 %v69, %v108
  %v125 = vadd.f32 %v70, %v109
  %v126 = vadd.f32 %v71, %v110
  %v127 = vadd.f32 %v72, %v111
  %v128 = vadd.f32 %v73, %v112
  %v129 = vadd.f32 %v74, %v113
  %v130 = vadd.f32 %v75, %v114
  %v131 = vadd.f32 %v76, %v115
  %v132 = vadd.f32 %v77, %v116
  %v133 = vadd.f32 %v78, %v117
  %v134 = vadd.f32 %v79, %v118
  %v135 = vadd.f32 %v80, %v119
  %v136 = vadd.f32 %v81, %v120
  %v137 = vadd.f32 %v82, %v121
  %v138 = vadd.f32 %v83, %v122
  %v139 = vadd.f32 %v84, %v123
  %v140 = vld [vmem:[%s5] sm:$0x1]
  %v142 = vlaneseq
  %v143 = vshrl.u32 %v142, 7
  %v144 = vsub.s32 0, %v143
  %v145 = vrot.slane %v140, %v144
  %v147 = vadd.f32 %v124, %v145
  %v148 = vadd.f32 %v125, %v145
  %v149 = vadd.f32 %v126, %v145
  %v150 = vadd.f32 %v127, %v145
  %v151 = vadd.f32 %v128, %v145
  %v152 = vadd.f32 %v129, %v145
  %v153 = vadd.f32 %v130, %v145
  %v154 = vadd.f32 %v131, %v145
  %v155 = vadd.f32 %v132, %v145
  %v156 = vadd.f32 %v133, %v145
  %v157 = vadd.f32 %v134, %v145
  %v158 = vadd.f32 %v135, %v145
  %v159 = vadd.f32 %v136, %v145
  %v160 = vadd.f32 %v137, %v145
  %v161 = vadd.f32 %v138, %v145
  %v162 = vadd.f32 %v139, %v145
  %vm163 = vcmp.ge.f32.partialorder %v147, 0.0
  %vm164 = vcmp.ge.f32.partialorder %v148, 0.0
  %vm165 = vcmp.ge.f32.partialorder %v149, 0.0
  %vm166 = vcmp.ge.f32.partialorder %v150, 0.0
  %vm167 = vcmp.ge.f32.partialorder %v151, 0.0
  %vm168 = vcmp.ge.f32.partialorder %v152, 0.0
  %vm169 = vcmp.ge.f32.partialorder %v153, 0.0
  %vm170 = vcmp.ge.f32.partialorder %v154, 0.0
  %vm171 = vcmp.ge.f32.partialorder %v155, 0.0
  %vm172 = vcmp.ge.f32.partialorder %v156, 0.0
  %vm173 = vcmp.ge.f32.partialorder %v157, 0.0
  %vm174 = vcmp.ge.f32.partialorder %v158, 0.0
  %vm175 = vcmp.ge.f32.partialorder %v159, 0.0
  %vm176 = vcmp.ge.f32.partialorder %v160, 0.0
  %vm177 = vcmp.ge.f32.partialorder %v161, 0.0
  %vm178 = vcmp.ge.f32.partialorder %v162, 0.0
  %v179 = vmul.f32 %v147, 0.2
  %v180 = vmul.f32 %v148, 0.2
  %v181 = vmul.f32 %v149, 0.2
  %v182 = vmul.f32 %v150, 0.2
  %v183 = vmul.f32 %v151, 0.2
  %v184 = vmul.f32 %v152, 0.2
  %v185 = vmul.f32 %v153, 0.2
  %v186 = vmul.f32 %v154, 0.2
  %v187 = vmul.f32 %v155, 0.2
  %v188 = vmul.f32 %v156, 0.2
  %v189 = vmul.f32 %v157, 0.2
  %v190 = vmul.f32 %v158, 0.2
  %v191 = vmul.f32 %v159, 0.2
  %v192 = vmul.f32 %v160, 0.2
  %v193 = vmul.f32 %v161, 0.2
  %v194 = vmul.f32 %v162, 0.2
  %v195 = vsel %vm163, %v147, %v179
  %v196 = vsel %vm164, %v148, %v180
  %v197 = vsel %vm165, %v149, %v181
  %v198 = vsel %vm166, %v150, %v182
  %v199 = vsel %vm167, %v151, %v183
  %v200 = vsel %vm168, %v152, %v184
  %v201 = vsel %vm169, %v153, %v185
  %v202 = vsel %vm170, %v154, %v186
  %v203 = vsel %vm171, %v155, %v187
  %v204 = vsel %vm172, %v156, %v188
  %v205 = vsel %vm173, %v157, %v189
  %v206 = vsel %vm174, %v158, %v190
  %v207 = vsel %vm175, %v159, %v191
  %v208 = vsel %vm176, %v160, %v192
  %v209 = vsel %vm177, %v161, %v193
  %v210 = vsel %vm178, %v162, %v194
  %vm211 = vcmask 523264
  %212 = vst.msk [vmem:[%s6] sm:$0xff] %vm211, %v195
  %213 = vst.msk [vmem:[%s6 + $0x8] sm:$0xff] %vm211, %v196
  %214 = vst.msk [vmem:[%s6 + $0x10] sm:$0xff] %vm211, %v197
  %215 = vst.msk [vmem:[%s6 + $0x18] sm:$0xff] %vm211, %v198
  %216 = vst.msk [vmem:[%s6 + $0x20] sm:$0xff] %vm211, %v199
  %217 = vst.msk [vmem:[%s6 + $0x28] sm:$0xff] %vm211, %v200
  %218 = vst.msk [vmem:[%s6 + $0x30] sm:$0xff] %vm211, %v201
  %219 = vst.msk [vmem:[%s6 + $0x38] sm:$0xff] %vm211, %v202
  %220 = vst.msk [vmem:[%s6 + $0x40] sm:$0xff] %vm211, %v203
  %221 = vst.msk [vmem:[%s6 + $0x48] sm:$0xff] %vm211, %v204
  %222 = vst.msk [vmem:[%s6 + $0x50] sm:$0xff] %vm211, %v205
  %223 = vst.msk [vmem:[%s6 + $0x58] sm:$0xff] %vm211, %v206
  %224 = vst.msk [vmem:[%s6 + $0x60] sm:$0xff] %vm211, %v207
  %225 = vst.msk [vmem:[%s6 + $0x68] sm:$0xff] %vm211, %v208
  %226 = vst.msk [vmem:[%s6 + $0x70] sm:$0xff] %vm211, %v209
  %227 = vst.msk [vmem:[%s6 + $0x78] sm:$0xff] %vm211, %v210
  // Predicated region
  $region26: #{res_trans_block.9} parent=0 // pred_check
    _
  $region27: #{res_trans_block.9} parent=0 // pred_check_branch
    %229 = sbr.rel (0) target = $region29
  $region28: #{res_trans_block.9} parent=0 // pred_region
    _
  $region29: #{res_trans_block.9} parent=0 // pred_fallthru
    _
  // Predicated region
  $region30: #{res_trans_block.9} parent=0 // pred_check
    _
  $region31: #{res_trans_block.9} parent=0 // pred_check_branch
    %231 = sbr.rel (0) target = $region33
  $region32: #{res_trans_block.9} parent=0 // pred_region
    _
  $region33: #{res_trans_block.9} parent=0 // pred_fallthru
    _

</llo_original>
